<compile_context>
chip_gen: v6e
topology: v6e:2x2x1
jax: 0.10.0
libtpu: 0.0.40
codegen_flags: <defaults>
</compile_context>

<pallas_src>
import jax
import jax.numpy as jnp
from jax.experimental import pallas as pl
from jax.experimental.pallas import tpu as pltpu

OBS_DIM = 11          # Hopper-v2 observation dim
HIDDEN = 64
MAX_TILE_B = 2048     # batch-tile cap; v5e users may prefer 1024 (smaller f32
                      # intermediates -> less VMEM spill pressure)


def value_net_kernel(w1_ref, w2_ref, misc_ref, x_ref, out_ref):
    """One batch tile, batch-on-sublanes layout.

    w1_ref  : [obs_dim, 64] f32 (resident)
    w2_ref  : [64, 64]      f32 (resident)
    misc_ref: [8, 64]       f32 (resident). row0=b1, row1=b2, row2=w3^T, row3[0]=b3
    x_ref   : [T, obs_dim]  f32 batch tile (native layout, no transpose needed)
    out_ref : [T, 1]        f32 value column
    """
    x = x_ref[...]                         # [T, obs_dim] f32
    b1 = misc_ref[0:1, :]                  # [1, 64]
    b2 = misc_ref[1:2, :]                  # [1, 64]
    w3_row = misc_ref[2:3, :]              # [1, 64]
    b3 = misc_ref[3:4, 0:1]                # [1, 1]

    # fc1 + tanh (MXU f32 matmul, EUP tanh; compute is hidden under the x DMA).
    h1 = jnp.tanh(jnp.dot(x, w1_ref[...], preferred_element_type=jnp.float32) + b1)
    # fc2 + tanh.
    h2 = jnp.tanh(jnp.dot(h1, w2_ref[...], preferred_element_type=jnp.float32) + b2)
    # fc3: output width 1 -> weighted lane reduction (XLU) instead of a skinny matmul.
    out_ref[...] = jnp.sum(h2 * w3_row, axis=1, keepdims=True) + b3


def init_params(key, obs_dim):
    """PyTorch nn.Linear-style init: U(-1/sqrt(fan_in), 1/sqrt(fan_in)).

    Weights stored as [in, out] (so forward is x @ W + b == PyTorch x @ W.T + b).
    """
    def linear(k, fan_in, fan_out):
        kw, kb = jax.random.split(k)
        bound = 1.0 / jnp.sqrt(jnp.float32(fan_in))
        w = jax.random.uniform(kw, (fan_in, fan_out), jnp.float32, -bound, bound)
        b = jax.random.uniform(kb, (fan_out,), jnp.float32, -bound, bound)
        return w, b

    k1, k2, k3 = jax.random.split(key, 3)
    w1, b1 = linear(k1, obs_dim, HIDDEN)
    w2, b2 = linear(k2, HIDDEN, HIDDEN)
    w3, b3 = linear(k3, HIDDEN, 1)
    return (w1, b1, w2, b2, w3, b3)


def pack_params(params):
    """w1/w2 stay as-is (f32); b1/b2/w3/b3 packed into one tiny [8, 64] slab."""
    w1, b1, w2, b2, w3, b3 = params
    misc = jnp.zeros((8, HIDDEN), jnp.float32)
    misc = misc.at[0, :].set(b1)
    misc = misc.at[1, :].set(b2)
    misc = misc.at[2, :].set(w3[:, 0])
    misc = misc.at[3, 0].set(b3[0])
    return w1.astype(jnp.float32), w2.astype(jnp.float32), misc


def _tiling(batch):
    """Pick (tile_b, n_tiles). Single full-batch tile for small B (one grid step,
    no per-step overhead on v5e/v6e); otherwise ~MAX_TILE_B tiles so v7x's two
    TensorCores each get work on the 'parallel' batch axis."""
    if batch <= MAX_TILE_B:
        return batch, 1
    n_tiles = -(-batch // MAX_TILE_B)
    tile = -(-batch // n_tiles)
    tile = ((tile + 7) // 8) * 8            # sublane multiple
    return tile, n_tiles


@jax.jit
def value_network_forward(x, w1, w2, misc):
    batch, obs_dim = x.shape
    assert w1.shape == (obs_dim, HIDDEN)
    tile_b, n_tiles = _tiling(batch)
    b_cover = tile_b * n_tiles
    # Only pads when B is awkward relative to the tiling; no-op (no extra HBM
    # pass) whenever b_cover == B, which includes the single-tile path.
    x_in = x if b_cover == batch else jnp.pad(x, ((0, b_cover - batch), (0, 0)))

    out = pl.pallas_call(
        value_net_kernel,
        out_shape=jax.ShapeDtypeStruct((b_cover, 1), jnp.float32),
        grid=(n_tiles,),
        in_specs=[
            pl.BlockSpec((obs_dim, HIDDEN), lambda i: (0, 0)),   # resident w1
            pl.BlockSpec((HIDDEN, HIDDEN), lambda i: (0, 0)),    # resident w2
            pl.BlockSpec((8, HIDDEN), lambda i: (0, 0)),         # resident biases / w3
            pl.BlockSpec((tile_b, obs_dim), lambda i: (i, 0)),   # batch tile of x
        ],
        out_specs=pl.BlockSpec((tile_b, 1), lambda i: (i, 0)),
        compiler_params=pltpu.CompilerParams(
            dimension_semantics=("parallel",),   # v7x: shard batch tiles over both TCs
            vmem_limit_bytes=32 * 1024 * 1024,
        ),
    )(w1, w2, misc, x_in)
    return out if b_cover == batch else out[:batch]


def reference_forward(x, params):
    """Pure-JAX f32 reference (matches the PyTorch module)."""
    w1, b1, w2, b2, w3, b3 = params
    h1 = jnp.tanh(jnp.dot(x, w1) + b1)
    h2 = jnp.tanh(jnp.dot(h1, w2) + b2)
    return jnp.dot(h2, w3) + b3


if __name__ == "__main__":
    key = jax.random.PRNGKey(0)
    k_params, k_x1, k_x2 = jax.random.split(key, 3)

    params = init_params(k_params, OBS_DIM)
    w1, w2, misc = pack_params(params)

    # B=1000: single full-batch tile path (no padding, one grid step).
    # B=2500: multi-tile grid + batch-padding fallback path.
    for batch, kx in ((1000, k_x1), (2500, k_x2)):
        x = jax.random.normal(kx, (batch, OBS_DIM), jnp.float32)
        value = jax.block_until_ready(value_network_forward(x, w1, w2, misc))
        ref = reference_forward(x, params)
        assert value.shape == (batch, 1), value.shape
        err = float(jnp.max(jnp.abs(value - ref)))
        assert err < 1e-3, err

    print("KERNEL_OK")
</pallas_src>

<mosaic_0001>
module attributes {stable_mosaic.version = 11 : i64} {
  func.func @value_net_kernel(%arg0: i32, %arg1: memref<11x64xf32, #tpu.memory_space<vmem>>, %arg2: memref<64x64xf32, #tpu.memory_space<vmem>>, %arg3: memref<8x64xf32, #tpu.memory_space<vmem>>, %arg4: memref<1000x11xf32, #tpu.memory_space<vmem>>, %arg5: memref<1000x1xf32, #tpu.memory_space<vmem>>) attributes {dimension_semantics = [#tpu.dimension_semantics<parallel>], iteration_bounds = array<i64: 1>, scalar_prefetch = 0 : i64, scratch_operands = 0 : i64, tpu.core_type = #tpu.core_type<tc>, window_params = [{pipeline_mode = #tpu.pipeline_mode<synchronous>, transform_indices = @transform_0, window_bounds = array<i64: 11, 64>}, {pipeline_mode = #tpu.pipeline_mode<synchronous>, transform_indices = @transform_1, window_bounds = array<i64: 64, 64>}, {pipeline_mode = #tpu.pipeline_mode<synchronous>, transform_indices = @transform_2, window_bounds = array<i64: 8, 64>}, {transform_indices = @transform_3, window_bounds = array<i64: 1000, 11>}, {transform_indices = @transform_4, window_bounds = array<i64: 1000, 1>}]} {
    %c0 = arith.constant 0 : index
    %c0_0 = arith.constant 0 : index
    %0 = vector.load %arg4[%c0, %c0_0] : memref<1000x11xf32, #tpu.memory_space<vmem>>, vector<1000x11xf32>
    %c0_1 = arith.constant 0 : index
    %c0_2 = arith.constant 0 : index
    %1 = vector.load %arg3[%c0_1, %c0_2] : memref<8x64xf32, #tpu.memory_space<vmem>>, vector<1x64xf32>
    %c1 = arith.constant 1 : index
    %c0_3 = arith.constant 0 : index
    %2 = vector.load %arg3[%c1, %c0_3] : memref<8x64xf32, #tpu.memory_space<vmem>>, vector<1x64xf32>
    %c2 = arith.constant 2 : index
    %c0_4 = arith.constant 0 : index
    %3 = vector.load %arg3[%c2, %c0_4] : memref<8x64xf32, #tpu.memory_space<vmem>>, vector<1x64xf32>
    %c3 = arith.constant 3 : index
    %c0_5 = arith.constant 0 : index
    %4 = vector.load %arg3[%c3, %c0_5] : memref<8x64xf32, #tpu.memory_space<vmem>>, vector<1x1xf32>
    %c0_6 = arith.constant 0 : index
    %c0_7 = arith.constant 0 : index
    %5 = vector.load %arg1[%c0_6, %c0_7] : memref<11x64xf32, #tpu.memory_space<vmem>>, vector<11x64xf32>
    %cst = arith.constant dense<0.000000e+00> : vector<1000x64xf32>
    %6 = tpu.matmul %0, %5, %cst {dimension_numbers = #tpu.dot_dimension_numbers<[1], [0], [0], [1], [0, 0, 1, 1], [], []>} : vector<1000x11xf32>, vector<11x64xf32>, vector<1000x64xf32> -> vector<1000x64xf32>
    %7 = vector.broadcast %1 : vector<1x64xf32> to vector<1000x64xf32>
    %8 = arith.addf %6, %7 : vector<1000x64xf32>
    %9 = math.tanh %8 : vector<1000x64xf32>
    %c0_8 = arith.constant 0 : index
    %c0_9 = arith.constant 0 : index
    %10 = vector.load %arg2[%c0_8, %c0_9] : memref<64x64xf32, #tpu.memory_space<vmem>>, vector<64x64xf32>
    %cst_10 = arith.constant dense<0.000000e+00> : vector<1000x64xf32>
    %11 = tpu.matmul %9, %10, %cst_10 {dimension_numbers = #tpu.dot_dimension_numbers<[1], [0], [0], [1], [0, 0, 1, 1], [], []>} : vector<1000x64xf32>, vector<64x64xf32>, vector<1000x64xf32> -> vector<1000x64xf32>
    %12 = vector.broadcast %2 : vector<1x64xf32> to vector<1000x64xf32>
    %13 = arith.addf %11, %12 : vector<1000x64xf32>
    %14 = math.tanh %13 : vector<1000x64xf32>
    %15 = vector.broadcast %3 : vector<1x64xf32> to vector<1000x64xf32>
    %16 = arith.mulf %14, %15 : vector<1000x64xf32>
    %cst_11 = arith.constant dense<0.000000e+00> : vector<1000xf32>
    %17 = vector.multi_reduction <add>, %16, %cst_11 [1] : vector<1000x64xf32> to vector<1000xf32>
    %18 = vector.shape_cast %17 : vector<1000xf32> to vector<1000x1xf32>
    %19 = vector.broadcast %4 : vector<1x1xf32> to vector<1000x1xf32>
    %20 = arith.addf %18, %19 : vector<1000x1xf32>
    %c0_12 = arith.constant 0 : index
    %c0_13 = arith.constant 0 : index
    %21 = vector.load %arg5[%c0_12, %c0_13] : memref<1000x1xf32, #tpu.memory_space<vmem>>, vector<1000x1xf32>
    tpu.vector_store %arg5[%c0_12, %c0_13], %20 {strides = array<i32>} : memref<1000x1xf32, #tpu.memory_space<vmem>>, vector<1000x1xf32>,
    return
  }
  func.func @transform_0(%arg0: i32) -> (i32, i32) {
    %c0_i32 = arith.constant 0 : i32
    %c0_i32_0 = arith.constant 0 : i32
    %c0_i32_1 = arith.constant 0 : i32
    return %c0_i32, %c0_i32_0 : i32, i32
  }
  func.func @transform_1(%arg0: i32) -> (i32, i32) {
    %c0_i32 = arith.constant 0 : i32
    %c0_i32_0 = arith.constant 0 : i32
    %c0_i32_1 = arith.constant 0 : i32
    return %c0_i32, %c0_i32_0 : i32, i32
  }
  func.func @transform_2(%arg0: i32) -> (i32, i32) {
    %c0_i32 = arith.constant 0 : i32
    %c0_i32_0 = arith.constant 0 : i32
    %c0_i32_1 = arith.constant 0 : i32
    return %c0_i32, %c0_i32_0 : i32, i32
  }
  func.func @transform_3(%arg0: i32) -> (i32, i32) {
    %c0_i32 = arith.constant 0 : i32
    %c0_i32_0 = arith.constant 0 : i32
    return %arg0, %c0_i32 : i32, i32
  }
  func.func @transform_4(%arg0: i32) -> (i32, i32) {
    %c0_i32 = arith.constant 0 : i32
    %c0_i32_0 = arith.constant 0 : i32
    return %arg0, %c0_i32 : i32, i32
  }
}

</mosaic_0001>

<llo_original>
// kernel: value_network_forward.1
$region0: #{value_network_forward.1}
  #allocation0 [shape = 'u32[]', space=smem, size = 0x4, offset = 0x4, fixed_abs, tag = 'smem constant byte address 0x4 - core index']
  #allocation1 [shape = 'u32[144,128]{1,0:T(1,128)}', space=vmem, size = 0x12000, scoped, tag = 'internal scratch']
  %s0 = inlined_call_operand.vmem [shape: f32[11,64], index: 0, kind: input, shape index: {}]
  %s1 = inlined_call_operand.vmem [shape: f32[64,64], index: 1, kind: input, shape index: {}]
  %s2 = inlined_call_operand.vmem [shape: f32[8,64], index: 2, kind: input, shape index: {}]
  %s3 = inlined_call_operand.vmem [shape: f32[1000,11], index: 3, kind: input, shape index: {}]
  %s4 = inlined_call_operand.vmem [shape: f32[1000,1], index: 4, kind: output, shape index: {}]
  %s5 = sld [smem:[#allocation0]]
  $region26: #{value_network_forward.1} parent=0
    _
  %s7 = ssub.s32 1, %s5
  %s8 = scalar_select 0, %s7, %s5
  // Predicated region
  $region2: #{value_network_forward.1} parent=0 // pred_check
    _
  $region3: #{value_network_forward.1} parent=0 // pred_check_branch
    %10 = sbr.rel (0) target = $region5
  $region4: #{value_network_forward.1} parent=0 // pred_region
    _
  $region5: #{value_network_forward.1} parent=0 // pred_fallthru
    _
  // Predicated region
  $region6: #{value_network_forward.1} parent=0 // pred_check
    _
  $region7: #{value_network_forward.1} parent=0 // pred_check_branch
    %12 = sbr.rel (0) target = $region9
  $region8: #{value_network_forward.1} parent=0 // pred_region
    _
  $region9: #{value_network_forward.1} parent=0 // pred_fallthru
    _
  // Predicated region
  $region10: #{value_network_forward.1} parent=0 // pred_check
    _
  $region11: #{value_network_forward.1} parent=0 // pred_check_branch
    %14 = sbr.rel (0) target = $region13
  $region12: #{value_network_forward.1} parent=0 // pred_region
    _
  $region13: #{value_network_forward.1} parent=0 // pred_fallthru
    _
  // Predicated region
  $region14: #{value_network_forward.1} parent=0 // pred_check
    _
  $region15: #{value_network_forward.1} parent=0 // pred_check_branch
    %16 = sbr.rel (0) target = $region17
  $region16: #{value_network_forward.1} parent=0 // pred_region
    _
  $region17: #{value_network_forward.1} parent=0 // pred_fallthru
    _
  %v17 = vld [vmem:[%s3] sm:$0xff]
  %v18 = vld [vmem:[%s3 + $0x8] sm:$0xff]
  %v19 = vld [vmem:[%s3 + $0x10] sm:$0xff]
  %v20 = vld [vmem:[%s3 + $0x18] sm:$0xff]
  %v21 = vld [vmem:[%s3 + $0x20] sm:$0xff]
  %v22 = vld [vmem:[%s3 + $0x28] sm:$0xff]
  %v23 = vld [vmem:[%s3 + $0x30] sm:$0xff]
  %v24 = vld [vmem:[%s3 + $0x38] sm:$0xff]
  %v25 = vld [vmem:[%s3 + $0x40] sm:$0xff]
  %v26 = vld [vmem:[%s3 + $0x48] sm:$0xff]
  %v27 = vld [vmem:[%s3 + $0x50] sm:$0xff]
  %v28 = vld [vmem:[%s3 + $0x58] sm:$0xff]
  %v29 = vld [vmem:[%s3 + $0x60] sm:$0xff]
  %v30 = vld [vmem:[%s3 + $0x68] sm:$0xff]
  %v31 = vld [vmem:[%s3 + $0x70] sm:$0xff]
  %v32 = vld [vmem:[%s3 + $0x78] sm:$0xff]
  %v33 = vld [vmem:[%s3 + $0x80] sm:$0xff]
  %v34 = vld [vmem:[%s3 + $0x88] sm:$0xff]
  %v35 = vld [vmem:[%s3 + $0x90] sm:$0xff]
  %v36 = vld [vmem:[%s3 + $0x98] sm:$0xff]
  %v37 = vld [vmem:[%s3 + $0xa0] sm:$0xff]
  %v38 = vld [vmem:[%s3 + $0xa8] sm:$0xff]
  %v39 = vld [vmem:[%s3 + $0xb0] sm:$0xff]
  %v40 = vld [vmem:[%s3 + $0xb8] sm:$0xff]
  %v41 = vld [vmem:[%s3 + $0xc0] sm:$0xff]
  %v42 = vld [vmem:[%s3 + $0xc8] sm:$0xff]
  %v43 = vld [vmem:[%s3 + $0xd0] sm:$0xff]
  %v44 = vld [vmem:[%s3 + $0xd8] sm:$0xff]
  %v45 = vld [vmem:[%s3 + $0xe0] sm:$0xff]
  %v46 = vld [vmem:[%s3 + $0xe8] sm:$0xff]
  %v47 = vld [vmem:[%s3 + $0xf0] sm:$0xff]
  %v48 = vld [vmem:[%s3 + $0xf8] sm:$0xff]
  %v49 = vld [vmem:[%s3 + $0x100] sm:$0xff]
  %v50 = vld [vmem:[%s3 + $0x108] sm:$0xff]
  %v51 = vld [vmem:[%s3 + $0x110] sm:$0xff]
  %v52 = vld [vmem:[%s3 + $0x118] sm:$0xff]
  %v53 = vld [vmem:[%s3 + $0x120] sm:$0xff]
  %v54 = vld [vmem:[%s3 + $0x128] sm:$0xff]
  %v55 = vld [vmem:[%s3 + $0x130] sm:$0xff]
  %v56 = vld [vmem:[%s3 + $0x138] sm:$0xff]
  %v57 = vld [vmem:[%s3 + $0x140] sm:$0xff]
  %v58 = vld [vmem:[%s3 + $0x148] sm:$0xff]
  %v59 = vld [vmem:[%s3 + $0x150] sm:$0xff]
  %v60 = vld [vmem:[%s3 + $0x158] sm:$0xff]
  %v61 = vld [vmem:[%s3 + $0x160] sm:$0xff]
  %v62 = vld [vmem:[%s3 + $0x168] sm:$0xff]
  %v63 = vld [vmem:[%s3 + $0x170] sm:$0xff]
  %v64 = vld [vmem:[%s3 + $0x178] sm:$0xff]
  %v65 = vld [vmem:[%s3 + $0x180] sm:$0xff]
  %v66 = vld [vmem:[%s3 + $0x188] sm:$0xff]
  %v67 = vld [vmem:[%s3 + $0x190] sm:$0xff]
  %v68 = vld [vmem:[%s3 + $0x198] sm:$0xff]
  %v69 = vld [vmem:[%s3 + $0x1a0] sm:$0xff]
  %v70 = vld [vmem:[%s3 + $0x1a8] sm:$0xff]
  %v71 = vld [vmem:[%s3 + $0x1b0] sm:$0xff]
  %v72 = vld [vmem:[%s3 + $0x1b8] sm:$0xff]
  %v73 = vld [vmem:[%s3 + $0x1c0] sm:$0xff]
  %v74 = vld [vmem:[%s3 + $0x1c8] sm:$0xff]
  %v75 = vld [vmem:[%s3 + $0x1d0] sm:$0xff]
  %v76 = vld [vmem:[%s3 + $0x1d8] sm:$0xff]
  %v77 = vld [vmem:[%s3 + $0x1e0] sm:$0xff]
  %v78 = vld [vmem:[%s3 + $0x1e8] sm:$0xff]
  %v79 = vld [vmem:[%s3 + $0x1f0] sm:$0xff]
  %v80 = vld [vmem:[%s3 + $0x1f8] sm:$0xff]
  %v81 = vld [vmem:[%s3 + $0x200] sm:$0xff]
  %v82 = vld [vmem:[%s3 + $0x208] sm:$0xff]
  %v83 = vld [vmem:[%s3 + $0x210] sm:$0xff]
  %v84 = vld [vmem:[%s3 + $0x218] sm:$0xff]
  %v85 = vld [vmem:[%s3 + $0x220] sm:$0xff]
  %v86 = vld [vmem:[%s3 + $0x228] sm:$0xff]
  %v87 = vld [vmem:[%s3 + $0x230] sm:$0xff]
  %v88 = vld [vmem:[%s3 + $0x238] sm:$0xff]
  %v89 = vld [vmem:[%s3 + $0x240] sm:$0xff]
  %v90 = vld [vmem:[%s3 + $0x248] sm:$0xff]
  %v91 = vld [vmem:[%s3 + $0x250] sm:$0xff]
  %v92 = vld [vmem:[%s3 + $0x258] sm:$0xff]
  %v93 = vld [vmem:[%s3 + $0x260] sm:$0xff]
  %v94 = vld [vmem:[%s3 + $0x268] sm:$0xff]
  %v95 = vld [vmem:[%s3 + $0x270] sm:$0xff]
  %v96 = vld [vmem:[%s3 + $0x278] sm:$0xff]
  %v97 = vld [vmem:[%s3 + $0x280] sm:$0xff]
  %v98 = vld [vmem:[%s3 + $0x288] sm:$0xff]
  %v99 = vld [vmem:[%s3 + $0x290] sm:$0xff]
  %v100 = vld [vmem:[%s3 + $0x298] sm:$0xff]
  %v101 = vld [vmem:[%s3 + $0x2a0] sm:$0xff]
  %v102 = vld [vmem:[%s3 + $0x2a8] sm:$0xff]
  %v103 = vld [vmem:[%s3 + $0x2b0] sm:$0xff]
  %v104 = vld [vmem:[%s3 + $0x2b8] sm:$0xff]
  %v105 = vld [vmem:[%s3 + $0x2c0] sm:$0xff]
  %v106 = vld [vmem:[%s3 + $0x2c8] sm:$0xff]
  %v107 = vld [vmem:[%s3 + $0x2d0] sm:$0xff]
  %v108 = vld [vmem:[%s3 + $0x2d8] sm:$0xff]
  %v109 = vld [vmem:[%s3 + $0x2e0] sm:$0xff]
  %v110 = vld [vmem:[%s3 + $0x2e8] sm:$0xff]
  %v111 = vld [vmem:[%s3 + $0x2f0] sm:$0xff]
  %v112 = vld [vmem:[%s3 + $0x2f8] sm:$0xff]
  %v113 = vld [vmem:[%s3 + $0x300] sm:$0xff]
  %v114 = vld [vmem:[%s3 + $0x308] sm:$0xff]
  %v115 = vld [vmem:[%s3 + $0x310] sm:$0xff]
  %v116 = vld [vmem:[%s3 + $0x318] sm:$0xff]
  %v117 = vld [vmem:[%s3 + $0x320] sm:$0xff]
  %v118 = vld [vmem:[%s3 + $0x328] sm:$0xff]
  %v119 = vld [vmem:[%s3 + $0x330] sm:$0xff]
  %v120 = vld [vmem:[%s3 + $0x338] sm:$0xff]
  %v121 = vld [vmem:[%s3 + $0x340] sm:$0xff]
  %v122 = vld [vmem:[%s3 + $0x348] sm:$0xff]
  %v123 = vld [vmem:[%s3 + $0x350] sm:$0xff]
  %v124 = vld [vmem:[%s3 + $0x358] sm:$0xff]
  %v125 = vld [vmem:[%s3 + $0x360] sm:$0xff]
  %v126 = vld [vmem:[%s3 + $0x368] sm:$0xff]
  %v127 = vld [vmem:[%s3 + $0x370] sm:$0xff]
  %v128 = vld [vmem:[%s3 + $0x378] sm:$0xff]
  %v129 = vld [vmem:[%s3 + $0x380] sm:$0xff]
  %v130 = vld [vmem:[%s3 + $0x388] sm:$0xff]
  %v131 = vld [vmem:[%s3 + $0x390] sm:$0xff]
  %v132 = vld [vmem:[%s3 + $0x398] sm:$0xff]
  %v133 = vld [vmem:[%s3 + $0x3a0] sm:$0xff]
  %v134 = vld [vmem:[%s3 + $0x3a8] sm:$0xff]
  %v135 = vld [vmem:[%s3 + $0x3b0] sm:$0xff]
  %v136 = vld [vmem:[%s3 + $0x3b8] sm:$0xff]
  %v137 = vld [vmem:[%s3 + $0x3c0] sm:$0xff]
  %v138 = vld [vmem:[%s3 + $0x3c8] sm:$0xff]
  %v139 = vld [vmem:[%s3 + $0x3d0] sm:$0xff]
  %v140 = vld [vmem:[%s3 + $0x3d8] sm:$0xff]
  %v141 = vld [vmem:[%s3 + $0x3e0] sm:$0xff]
  %v142 = vld [vmem:[%s2] sm:$0x1]
  %v143 = vld [vmem:[%s2 + $0x1] sm:$0x1]
  %v144 = vld [vmem:[%s2 + $0x2] sm:$0x1]
  %v145 = vld [vmem:[%s2 + $0x3] sm:$0x1]
  %v146 = vld [vmem:[%s0] sm:$0xff]
  %v147 = vld [vmem:[%s0 + $0x8] sm:$0x7]
  %v148 = vlaneseq
  %v149 = vshrl.u32 %v148, 7
  %v150 = vsub.s32 0, %v149
  %v151 = vrot.slane %v142, %v150
  %vm152 = vcmask 89088
  %v154 = vsel %vm152, %v17, 0
  %v157 = vsel %vm152, %v18, 0
  %v160 = vsel %vm152, %v19, 0
  %v163 = vsel %vm152, %v20, 0
  %v166 = vsel %vm152, %v21, 0
  %v169 = vsel %vm152, %v22, 0
  %v172 = vsel %vm152, %v23, 0
  %v175 = vsel %vm152, %v24, 0
  %v178 = vsel %vm152, %v25, 0
  %v181 = vsel %vm152, %v26, 0
  %v184 = vsel %vm152, %v27, 0
  %v187 = vsel %vm152, %v28, 0
  %v190 = vsel %vm152, %v29, 0
  %v193 = vsel %vm152, %v30, 0
  %v196 = vsel %vm152, %v31, 0
  %v199 = vsel %vm152, %v32, 0
  %v202 = vsel %vm152, %v33, 0
  %v205 = vsel %vm152, %v34, 0
  %v208 = vsel %vm152, %v35, 0
  %v211 = vsel %vm152, %v36, 0
  %v214 = vsel %vm152, %v37, 0
  %v217 = vsel %vm152, %v38, 0
  %v220 = vsel %vm152, %v39, 0
  %v223 = vsel %vm152, %v40, 0
  %v226 = vsel %vm152, %v41, 0
  %v229 = vsel %vm152, %v42, 0
  %v232 = vsel %vm152, %v43, 0
  %v235 = vsel %vm152, %v44, 0
  %v238 = vsel %vm152, %v45, 0
  %v241 = vsel %vm152, %v46, 0
  %v244 = vsel %vm152, %v47, 0
  %v247 = vsel %vm152, %v48, 0
  %v250 = vsel %vm152, %v49, 0
  %v253 = vsel %vm152, %v50, 0
  %v256 = vsel %vm152, %v51, 0
  %v259 = vsel %vm152, %v52, 0
  %v262 = vsel %vm152, %v53, 0
  %v265 = vsel %vm152, %v54, 0
  %v268 = vsel %vm152, %v55, 0
  %v271 = vsel %vm152, %v56, 0
  %v274 = vsel %vm152, %v57, 0
  %v277 = vsel %vm152, %v58, 0
  %v280 = vsel %vm152, %v59, 0
  %v283 = vsel %vm152, %v60, 0
  %v286 = vsel %vm152, %v61, 0
  %v289 = vsel %vm152, %v62, 0
  %v292 = vsel %vm152, %v63, 0
  %v295 = vsel %vm152, %v64, 0
  %v298 = vsel %vm152, %v65, 0
  %v301 = vsel %vm152, %v66, 0
  %v304 = vsel %vm152, %v67, 0
  %v307 = vsel %vm152, %v68, 0
  %v310 = vsel %vm152, %v69, 0
  %v313 = vsel %vm152, %v70, 0
  %v316 = vsel %vm152, %v71, 0
  %v319 = vsel %vm152, %v72, 0
  %v322 = vsel %vm152, %v73, 0
  %v325 = vsel %vm152, %v74, 0
  %v328 = vsel %vm152, %v75, 0
  %v331 = vsel %vm152, %v76, 0
  %v334 = vsel %vm152, %v77, 0
  %v337 = vsel %vm152, %v78, 0
  %v340 = vsel %vm152, %v79, 0
  %v343 = vsel %vm152, %v80, 0
  %v346 = vsel %vm152, %v81, 0
  %v349 = vsel %vm152, %v82, 0
  %v352 = vsel %vm152, %v83, 0
  %v355 = vsel %vm152, %v84, 0
  %v358 = vsel %vm152, %v85, 0
  %v361 = vsel %vm152, %v86, 0
  %v364 = vsel %vm152, %v87, 0
  %v367 = vsel %vm152, %v88, 0
  %v370 = vsel %vm152, %v89, 0
  %v373 = vsel %vm152, %v90, 0
  %v376 = vsel %vm152, %v91, 0
  %v379 = vsel %vm152, %v92, 0
  %v382 = vsel %vm152, %v93, 0
  %v385 = vsel %vm152, %v94, 0
  %v388 = vsel %vm152, %v95, 0
  %v391 = vsel %vm152, %v96, 0
  %v394 = vsel %vm152, %v97, 0
  %v397 = vsel %vm152, %v98, 0
  %v400 = vsel %vm152, %v99, 0
  %v403 = vsel %vm152, %v100, 0
  %v406 = vsel %vm152, %v101, 0
  %v409 = vsel %vm152, %v102, 0
  %v412 = vsel %vm152, %v103, 0
  %v415 = vsel %vm152, %v104, 0
  %v418 = vsel %vm152, %v105, 0
  %v421 = vsel %vm152, %v106, 0
  %v424 = vsel %vm152, %v107, 0
  %v427 = vsel %vm152, %v108, 0
  %v430 = vsel %vm152, %v109, 0
  %v433 = vsel %vm152, %v110, 0
  %v436 = vsel %vm152, %v111, 0
  %v439 = vsel %vm152, %v112, 0
  %v442 = vsel %vm152, %v113, 0
  %v445 = vsel %vm152, %v114, 0
  %v448 = vsel %vm152, %v115, 0
  %v451 = vsel %vm152, %v116, 0
  %v454 = vsel %vm152, %v117, 0
  %v457 = vsel %vm152, %v118, 0
  %v460 = vsel %vm152, %v119, 0
  %v463 = vsel %vm152, %v120, 0
  %v466 = vsel %vm152, %v121, 0
  %v469 = vsel %vm152, %v122, 0
  %v472 = vsel %vm152, %v123, 0
  %v475 = vsel %vm152, %v124, 0
  %v478 = vsel %vm152, %v125, 0
  %v481 = vsel %vm152, %v126, 0
  %v484 = vsel %vm152, %v127, 0
  %v487 = vsel %vm152, %v128, 0
  %v490 = vsel %vm152, %v129, 0
  %v493 = vsel %vm152, %v130, 0
  %v496 = vsel %vm152, %v131, 0
  %v499 = vsel %vm152, %v132, 0
  %v502 = vsel %vm152, %v133, 0
  %v505 = vsel %vm152, %v134, 0
  %v508 = vsel %vm152, %v135, 0
  %v511 = vsel %vm152, %v136, 0
  %v514 = vsel %vm152, %v137, 0
  %v517 = vsel %vm152, %v138, 0
  %v520 = vsel %vm152, %v139, 0
  %v523 = vsel %vm152, %v140, 0
  %v526 = vsel %vm152, %v141, 0
  %vm528 = vcmask 1042432
  %v530 = vsel %vm528, %v147, 0
  %532 = vmatprep.subr.mxu0 0.0
  %533 = vmatpush1.msra.mxu0 0.0
  %534 = vmatprep.subr.mxu0 0.0
  %535 = vmatpush1.msra.mxu0 0.0
  %536 = vmatprep.subr.mxu0 0.0
  %537 = vmatpush1.msra.mxu0 0.0
  %538 = vmatprep.subr.mxu0 0.0
  %539 = vmatpush1.msra.mxu0 0.0
  %540 = vmatprep.subr.mxu0 0.0
  %541 = vmatpush1.msra.mxu0 0.0
  %542 = vmatprep.subr.mxu0 0.0
  %543 = vmatpush1.msra.mxu0 0.0
  %544 = vmatprep.subr.mxu0 0.0
  %545 = vmatpush1.msra.mxu0 0.0
  %546 = vmatprep.subr.mxu0 0.0
  %547 = vmatpush1.msra.mxu0 0.0
  %548 = vmatprep.subr.mxu0 0.0
  %549 = vmatpush1.msra.mxu0 0.0
  %550 = vmatprep.subr.mxu0 0.0
  %551 = vmatpush1.msra.mxu0 0.0
  %552 = vmatprep.subr.mxu0 0.0
  %553 = vmatpush1.msra.mxu0 0.0
  %554 = vmatprep.subr.mxu0 0.0
  %555 = vmatpush1.msra.mxu0 0.0
  %556 = vmatprep.subr.mxu0 0.0
  %557 = vmatpush1.msra.mxu0 0.0
  %558 = vmatprep.subr.mxu0 0.0
  %559 = vmatpush1.msra.mxu0 0.0
  %560 = vmatprep.subr.mxu0 0.0
  %561 = vmatpush1.msra.mxu0 %v530
  %562 = vmatprep.subr.mxu0 0.0
  %563 = vmatpush1.msra.mxu0 %v146
  %564 = vmatprep.subr.mxu0 0.0
  %565 = vmatpush2.msra.mxu0 0.0
  %566 = vmatprep.subr.mxu0 0.0
  %567 = vmatpush2.msra.mxu0 0.0
  %568 = vmatprep.subr.mxu0 0.0
  %569 = vmatpush2.msra.mxu0 0.0
  %570 = vmatprep.subr.mxu0 0.0
  %571 = vmatpush2.msra.mxu0 0.0
  %572 = vmatprep.subr.mxu0 0.0
  %573 = vmatpush2.msra.mxu0 0.0
  %574 = vmatprep.subr.mxu0 0.0
  %575 = vmatpush2.msra.mxu0 0.0
  %576 = vmatprep.subr.mxu0 0.0
  %577 = vmatpush2.msra.mxu0 0.0
  %578 = vmatprep.subr.mxu0 0.0
  %579 = vmatpush2.msra.mxu0 0.0
  %580 = vmatprep.subr.mxu0 0.0
  %581 = vmatpush2.msra.mxu0 0.0
  %582 = vmatprep.subr.mxu0 0.0
  %583 = vmatpush2.msra.mxu0 0.0
  %584 = vmatprep.subr.mxu0 0.0
  %585 = vmatpush2.msra.mxu0 0.0
  %586 = vmatprep.subr.mxu0 0.0
  %587 = vmatpush2.msra.mxu0 0.0
  %588 = vmatprep.subr.mxu0 0.0
  %589 = vmatpush2.msra.mxu0 0.0
  %590 = vmatprep.subr.mxu0 0.0
  %591 = vmatpush2.msra.mxu0 0.0
  %592 = vmatprep.subr.mxu0 0.0
  %593 = vmatpush2.msra.mxu0 0.0
  %594 = vmatprep.subr.mxu0 0.0
  %595 = vmatpush2.msra.mxu0 0.0
  %596 = vmatprep.mubr.f32.mxu0 0.0
  %597 = vmatmul.mubr.f32.gmra.mxu0 %v154
  %v598 = vpop.f32.mrf.mxu0
  %v599 = vadd.f32 %v151, %v598
  %v600 = vpop.f32.mrf.mxu0
  %601 = vmatprep.mubr.f32.mxu0 0.0
  %602 = vmatmul.mubr.f32.gmra.mxu0 %v157
  %v603 = vpop.f32.mrf.mxu0
  %v604 = vadd.f32 %v151, %v603
  %v605 = vpop.f32.mrf.mxu0
  %606 = vmatprep.mubr.f32.mxu0 0.0
  %607 = vmatmul.mubr.f32.gmra.mxu0 %v160
  %v608 = vpop.f32.mrf.mxu0
  %v609 = vadd.f32 %v151, %v608
  %v610 = vpop.f32.mrf.mxu0
  %611 = vmatprep.mubr.f32.mxu0 0.0
  %612 = vmatmul.mubr.f32.gmra.mxu0 %v163
  %v613 = vpop.f32.mrf.mxu0
  %v614 = vadd.f32 %v151, %v613
  %v615 = vpop.f32.mrf.mxu0
  %616 = vmatprep.mubr.f32.mxu0 0.0
  %617 = vmatmul.mubr.f32.gmra.mxu0 %v166
  %v618 = vpop.f32.mrf.mxu0
  %v619 = vadd.f32 %v151, %v618
  %v620 = vpop.f32.mrf.mxu0
  %621 = vmatprep.mubr.f32.mxu0 0.0
  %622 = vmatmul.mubr.f32.gmra.mxu0 %v169
  %v623 = vpop.f32.mrf.mxu0
  %v624 = vadd.f32 %v151, %v623
  %v625 = vpop.f32.mrf.mxu0
  %626 = vmatprep.mubr.f32.mxu0 0.0
  %627 = vmatmul.mubr.f32.gmra.mxu0 %v172
  %v628 = vpop.f32.mrf.mxu0
  %v629 = vadd.f32 %v151, %v628
  %v630 = vpop.f32.mrf.mxu0
  %631 = vmatprep.mubr.f32.mxu0 0.0
  %632 = vmatmul.mubr.f32.gmra.mxu0 %v175
  %v633 = vpop.f32.mrf.mxu0
  %v634 = vadd.f32 %v151, %v633
  %v635 = vpop.f32.mrf.mxu0
  %636 = vmatprep.mubr.f32.mxu0 0.0
  %637 = vmatmul.mubr.f32.gmra.mxu0 %v178
  %v638 = vpop.f32.mrf.mxu0
  %v639 = vadd.f32 %v151, %v638
  %v640 = vpop.f32.mrf.mxu0
  %641 = vmatprep.mubr.f32.mxu0 0.0
  %642 = vmatmul.mubr.f32.gmra.mxu0 %v181
  %v643 = vpop.f32.mrf.mxu0
  %v644 = vadd.f32 %v151, %v643
  %v645 = vpop.f32.mrf.mxu0
  %646 = vmatprep.mubr.f32.mxu0 0.0
  %647 = vmatmul.mubr.f32.gmra.mxu0 %v184
  %v648 = vpop.f32.mrf.mxu0
  %v649 = vadd.f32 %v151, %v648
  %v650 = vpop.f32.mrf.mxu0
  %651 = vmatprep.mubr.f32.mxu0 0.0
  %652 = vmatmul.mubr.f32.gmra.mxu0 %v187
  %v653 = vpop.f32.mrf.mxu0
  %v654 = vadd.f32 %v151, %v653
  %v655 = vpop.f32.mrf.mxu0
  %656 = vmatprep.mubr.f32.mxu0 0.0
  %657 = vmatmul.mubr.f32.gmra.mxu0 %v190
  %v658 = vpop.f32.mrf.mxu0
  %v659 = vadd.f32 %v151, %v658
  %v660 = vpop.f32.mrf.mxu0
  %661 = vmatprep.mubr.f32.mxu0 0.0
  %662 = vmatmul.mubr.f32.gmra.mxu0 %v193
  %v663 = vpop.f32.mrf.mxu0
  %v664 = vadd.f32 %v151, %v663
  %v665 = vpop.f32.mrf.mxu0
  %666 = vmatprep.mubr.f32.mxu0 0.0
  %667 = vmatmul.mubr.f32.gmra.mxu0 %v196
  %v668 = vpop.f32.mrf.mxu0
  %v669 = vadd.f32 %v151, %v668
  %v670 = vpop.f32.mrf.mxu0
  %671 = vmatprep.mubr.f32.mxu0 0.0
  %672 = vmatmul.mubr.f32.gmra.mxu0 %v199
  %v673 = vpop.f32.mrf.mxu0
  %v674 = vadd.f32 %v151, %v673
  %v675 = vpop.f32.mrf.mxu0
  %676 = vmatprep.mubr.f32.mxu0 0.0
  %677 = vmatmul.mubr.f32.gmra.mxu0 %v202
  %v678 = vpop.f32.mrf.mxu0
  %v679 = vadd.f32 %v151, %v678
  %v680 = vpop.f32.mrf.mxu0
  %681 = vmatprep.mubr.f32.mxu0 0.0
  %682 = vmatmul.mubr.f32.gmra.mxu0 %v205
  %v683 = vpop.f32.mrf.mxu0
  %v684 = vadd.f32 %v151, %v683
  %v685 = vpop.f32.mrf.mxu0
  %686 = vmatprep.mubr.f32.mxu0 0.0
  %687 = vmatmul.mubr.f32.gmra.mxu0 %v208
  %v688 = vpop.f32.mrf.mxu0
  %v689 = vadd.f32 %v151, %v688
  %v690 = vpop.f32.mrf.mxu0
  %691 = vmatprep.mubr.f32.mxu0 0.0
  %692 = vmatmul.mubr.f32.gmra.mxu0 %v211
  %v693 = vpop.f32.mrf.mxu0
  %v694 = vadd.f32 %v151, %v693
  %v695 = vpop.f32.mrf.mxu0
  %696 = vmatprep.mubr.f32.mxu0 0.0
  %697 = vmatmul.mubr.f32.gmra.mxu0 %v214
  %v698 = vpop.f32.mrf.mxu0
  %v699 = vadd.f32 %v151, %v698
  %v700 = vpop.f32.mrf.mxu0
  %701 = vmatprep.mubr.f32.mxu0 0.0
  %702 = vmatmul.mubr.f32.gmra.mxu0 %v217
  %v703 = vpop.f32.mrf.mxu0
  %v704 = vadd.f32 %v151, %v703
  %v705 = vpop.f32.mrf.mxu0
  %706 = vmatprep.mubr.f32.mxu0 0.0
  %707 = vmatmul.mubr.f32.gmra.mxu0 %v220
  %v708 = vpop.f32.mrf.mxu0
  %v709 = vadd.f32 %v151, %v708
  %v710 = vpop.f32.mrf.mxu0
  %711 = vmatprep.mubr.f32.mxu0 0.0
  %712 = vmatmul.mubr.f32.gmra.mxu0 %v223
  %v713 = vpop.f32.mrf.mxu0
  %v714 = vadd.f32 %v151, %v713
  %v715 = vpop.f32.mrf.mxu0
  %716 = vmatprep.mubr.f32.mxu0 0.0
  %717 = vmatmul.mubr.f32.gmra.mxu0 %v226
  %v718 = vpop.f32.mrf.mxu0
  %v719 = vadd.f32 %v151, %v718
  %v720 = vpop.f32.mrf.mxu0
  %721 = vmatprep.mubr.f32.mxu0 0.0
  %722 = vmatmul.mubr.f32.gmra.mxu0 %v229
  %v723 = vpop.f32.mrf.mxu0
  %v724 = vadd.f32 %v151, %v723
  %v725 = vpop.f32.mrf.mxu0
  %726 = vmatprep.mubr.f32.mxu0 0.0
  %727 = vmatmul.mubr.f32.gmra.mxu0 %v232
  %v728 = vpop.f32.mrf.mxu0
  %v729 = vadd.f32 %v151, %v728
  %v730 = vpop.f32.mrf.mxu0
  %731 = vmatprep.mubr.f32.mxu0 0.0
  %732 = vmatmul.mubr.f32.gmra.mxu0 %v235
  %v733 = vpop.f32.mrf.mxu0
  %v734 = vadd.f32 %v151, %v733
  %v735 = vpop.f32.mrf.mxu0
  %736 = vmatprep.mubr.f32.mxu0 0.0
  %737 = vmatmul.mubr.f32.gmra.mxu0 %v238
  %v738 = vpop.f32.mrf.mxu0
  %v739 = vadd.f32 %v151, %v738
  %v740 = vpop.f32.mrf.mxu0
  %741 = vmatprep.mubr.f32.mxu0 0.0
  %742 = vmatmul.mubr.f32.gmra.mxu0 %v241
  %v743 = vpop.f32.mrf.mxu0
  %v744 = vadd.f32 %v151, %v743
  %v745 = vpop.f32.mrf.mxu0
  %746 = vmatprep.mubr.f32.mxu0 0.0
  %747 = vmatmul.mubr.f32.gmra.mxu0 %v244
  %v748 = vpop.f32.mrf.mxu0
  %v749 = vadd.f32 %v151, %v748
  %v750 = vpop.f32.mrf.mxu0
  %751 = vmatprep.mubr.f32.mxu0 0.0
  %752 = vmatmul.mubr.f32.gmra.mxu0 %v247
  %v753 = vpop.f32.mrf.mxu0
  %v754 = vadd.f32 %v151, %v753
  %v755 = vpop.f32.mrf.mxu0
  %756 = vmatprep.mubr.f32.mxu0 0.0
  %757 = vmatmul.mubr.f32.gmra.mxu0 %v250
  %v758 = vpop.f32.mrf.mxu0
  %v759 = vadd.f32 %v151, %v758
  %v760 = vpop.f32.mrf.mxu0
  %761 = vmatprep.mubr.f32.mxu0 0.0
  %762 = vmatmul.mubr.f32.gmra.mxu0 %v253
  %v763 = vpop.f32.mrf.mxu0
  %v764 = vadd.f32 %v151, %v763
  %v765 = vpop.f32.mrf.mxu0
  %766 = vmatprep.mubr.f32.mxu0 0.0
  %767 = vmatmul.mubr.f32.gmra.mxu0 %v256
  %v768 = vpop.f32.mrf.mxu0
  %v769 = vadd.f32 %v151, %v768
  %v770 = vpop.f32.mrf.mxu0
  %771 = vmatprep.mubr.f32.mxu0 0.0
  %772 = vmatmul.mubr.f32.gmra.mxu0 %v259
  %v773 = vpop.f32.mrf.mxu0
  %v774 = vadd.f32 %v151, %v773
  %v775 = vpop.f32.mrf.mxu0
  %776 = vmatprep.mubr.f32.mxu0 0.0
  %777 = vmatmul.mubr.f32.gmra.mxu0 %v262
  %v778 = vpop.f32.mrf.mxu0
  %v779 = vadd.f32 %v151, %v778
  %v780 = vpop.f32.mrf.mxu0
  %781 = vmatprep.mubr.f32.mxu0 0.0
  %782 = vmatmul.mubr.f32.gmra.mxu0 %v265
  %v783 = vpop.f32.mrf.mxu0
  %v784 = vadd.f32 %v151, %v783
  %v785 = vpop.f32.mrf.mxu0
  %786 = vmatprep.mubr.f32.mxu0 0.0
  %787 = vmatmul.mubr.f32.gmra.mxu0 %v268
  %v788 = vpop.f32.mrf.mxu0
  %v789 = vadd.f32 %v151, %v788
  %v790 = vpop.f32.mrf.mxu0
  %791 = vmatprep.mubr.f32.mxu0 0.0
  %792 = vmatmul.mubr.f32.gmra.mxu0 %v271
  %v793 = vpop.f32.mrf.mxu0
  %v794 = vadd.f32 %v151, %v793
  %v795 = vpop.f32.mrf.mxu0
  %796 = vmatprep.mubr.f32.mxu0 0.0
  %797 = vmatmul.mubr.f32.gmra.mxu0 %v274
  %v798 = vpop.f32.mrf.mxu0
  %v799 = vadd.f32 %v151, %v798
  %v800 = vpop.f32.mrf.mxu0
  %801 = vmatprep.mubr.f32.mxu0 0.0
  %802 = vmatmul.mubr.f32.gmra.mxu0 %v277
  %v803 = vpop.f32.mrf.mxu0
  %v804 = vadd.f32 %v151, %v803
  %v805 = vpop.f32.mrf.mxu0
  %806 = vmatprep.mubr.f32.mxu0 0.0
  %807 = vmatmul.mubr.f32.gmra.mxu0 %v280
  %v808 = vpop.f32.mrf.mxu0
  %v809 = vadd.f32 %v151, %v808
  %v810 = vpop.f32.mrf.mxu0
  %811 = vmatprep.mubr.f32.mxu0 0.0
  %812 = vmatmul.mubr.f32.gmra.mxu0 %v283
  %v813 = vpop.f32.mrf.mxu0
  %v814 = vadd.f32 %v151, %v813
  %v815 = vpop.f32.mrf.mxu0
  %816 = vmatprep.mubr.f32.mxu0 0.0
  %817 = vmatmul.mubr.f32.gmra.mxu0 %v286
  %v818 = vpop.f32.mrf.mxu0
  %v819 = vadd.f32 %v151, %v818
  %v820 = vpop.f32.mrf.mxu0
  %821 = vmatprep.mubr.f32.mxu0 0.0
  %822 = vmatmul.mubr.f32.gmra.mxu0 %v289
  %v823 = vpop.f32.mrf.mxu0
  %v824 = vadd.f32 %v151, %v823
  %v825 = vpop.f32.mrf.mxu0
  %826 = vmatprep.mubr.f32.mxu0 0.0
  %827 = vmatmul.mubr.f32.gmra.mxu0 %v292
  %v828 = vpop.f32.mrf.mxu0
  %v829 = vadd.f32 %v151, %v828
  %v830 = vpop.f32.mrf.mxu0
  %831 = vmatprep.mubr.f32.mxu0 0.0
  %832 = vmatmul.mubr.f32.gmra.mxu0 %v295
  %v833 = vpop.f32.mrf.mxu0
  %v834 = vadd.f32 %v151, %v833
  %v835 = vpop.f32.mrf.mxu0
  %836 = vmatprep.mubr.f32.mxu0 0.0
  %837 = vmatmul.mubr.f32.gmra.mxu0 %v298
  %v838 = vpop.f32.mrf.mxu0
  %v839 = vadd.f32 %v151, %v838
  %v840 = vpop.f32.mrf.mxu0
  %841 = vmatprep.mubr.f32.mxu0 0.0
  %842 = vmatmul.mubr.f32.gmra.mxu0 %v301
  %v843 = vpop.f32.mrf.mxu0
  %v844 = vadd.f32 %v151, %v843
  %v845 = vpop.f32.mrf.mxu0
  %846 = vmatprep.mubr.f32.mxu0 0.0
  %847 = vmatmul.mubr.f32.gmra.mxu0 %v304
  %v848 = vpop.f32.mrf.mxu0
  %v849 = vadd.f32 %v151, %v848
  %v850 = vpop.f32.mrf.mxu0
  %851 = vmatprep.mubr.f32.mxu0 0.0
  %852 = vmatmul.mubr.f32.gmra.mxu0 %v307
  %v853 = vpop.f32.mrf.mxu0
  %v854 = vadd.f32 %v151, %v853
  %v855 = vpop.f32.mrf.mxu0
  %856 = vmatprep.mubr.f32.mxu0 0.0
  %857 = vmatmul.mubr.f32.gmra.mxu0 %v310
  %v858 = vpop.f32.mrf.mxu0
  %v859 = vadd.f32 %v151, %v858
  %v860 = vpop.f32.mrf.mxu0
  %861 = vmatprep.mubr.f32.mxu0 0.0
  %862 = vmatmul.mubr.f32.gmra.mxu0 %v313
  %v863 = vpop.f32.mrf.mxu0
  %v864 = vadd.f32 %v151, %v863
  %v865 = vpop.f32.mrf.mxu0
  %866 = vmatprep.mubr.f32.mxu0 0.0
  %867 = vmatmul.mubr.f32.gmra.mxu0 %v316
  %v868 = vpop.f32.mrf.mxu0
  %v869 = vadd.f32 %v151, %v868
  %v870 = vpop.f32.mrf.mxu0
  %871 = vmatprep.mubr.f32.mxu0 0.0
  %872 = vmatmul.mubr.f32.gmra.mxu0 %v319
  %v873 = vpop.f32.mrf.mxu0
  %v874 = vadd.f32 %v151, %v873
  %v875 = vpop.f32.mrf.mxu0
  %876 = vmatprep.mubr.f32.mxu0 0.0
  %877 = vmatmul.mubr.f32.gmra.mxu0 %v322
  %v878 = vpop.f32.mrf.mxu0
  %v879 = vadd.f32 %v151, %v878
  %v880 = vpop.f32.mrf.mxu0
  %881 = vmatprep.mubr.f32.mxu0 0.0
  %882 = vmatmul.mubr.f32.gmra.mxu0 %v325
  %v883 = vpop.f32.mrf.mxu0
  %v884 = vadd.f32 %v151, %v883
  %v885 = vpop.f32.mrf.mxu0
  %886 = vmatprep.mubr.f32.mxu0 0.0
  %887 = vmatmul.mubr.f32.gmra.mxu0 %v328
  %v888 = vpop.f32.mrf.mxu0
  %v889 = vadd.f32 %v151, %v888
  %v890 = vpop.f32.mrf.mxu0
  %891 = vmatprep.mubr.f32.mxu0 0.0
  %892 = vmatmul.mubr.f32.gmra.mxu0 %v331
  %v893 = vpop.f32.mrf.mxu0
  %v894 = vadd.f32 %v151, %v893
  %v895 = vpop.f32.mrf.mxu0
  %896 = vmatprep.mubr.f32.mxu0 0.0
  %897 = vmatmul.mubr.f32.gmra.mxu0 %v334
  %v898 = vpop.f32.mrf.mxu0
  %v899 = vadd.f32 %v151, %v898
  %v900 = vpop.f32.mrf.mxu0
  %901 = vmatprep.mubr.f32.mxu0 0.0
  %902 = vmatmul.mubr.f32.gmra.mxu0 %v337
  %v903 = vpop.f32.mrf.mxu0
  %v904 = vadd.f32 %v151, %v903
  %v905 = vpop.f32.mrf.mxu0
  %906 = vmatprep.mubr.f32.mxu0 0.0
  %907 = vmatmul.mubr.f32.gmra.mxu0 %v340
  %v908 = vpop.f32.mrf.mxu0
  %v909 = vadd.f32 %v151, %v908
  %v910 = vpop.f32.mrf.mxu0
  %911 = vmatprep.mubr.f32.mxu0 0.0
  %912 = vmatmul.mubr.f32.gmra.mxu0 %v343
  %v913 = vpop.f32.mrf.mxu0
  %v914 = vadd.f32 %v151, %v913
  %v915 = vpop.f32.mrf.mxu0
  %916 = vmatprep.mubr.f32.mxu0 0.0
  %917 = vmatmul.mubr.f32.gmra.mxu0 %v346
  %v918 = vpop.f32.mrf.mxu0
  %v919 = vadd.f32 %v151, %v918
  %v920 = vpop.f32.mrf.mxu0
  %921 = vmatprep.mubr.f32.mxu0 0.0
  %922 = vmatmul.mubr.f32.gmra.mxu0 %v349
  %v923 = vpop.f32.mrf.mxu0
  %v924 = vadd.f32 %v151, %v923
  %v925 = vpop.f32.mrf.mxu0
  %926 = vmatprep.mubr.f32.mxu0 0.0
  %927 = vmatmul.mubr.f32.gmra.mxu0 %v352
  %v928 = vpop.f32.mrf.mxu0
  %v929 = vadd.f32 %v151, %v928
  %v930 = vpop.f32.mrf.mxu0
  %931 = vmatprep.mubr.f32.mxu0 0.0
  %932 = vmatmul.mubr.f32.gmra.mxu0 %v355
  %v933 = vpop.f32.mrf.mxu0
  %v934 = vadd.f32 %v151, %v933
  %v935 = vpop.f32.mrf.mxu0
  %936 = vmatprep.mubr.f32.mxu0 0.0
  %937 = vmatmul.mubr.f32.gmra.mxu0 %v358
  %v938 = vpop.f32.mrf.mxu0
  %v939 = vadd.f32 %v151, %v938
  %v940 = vpop.f32.mrf.mxu0
  %941 = vmatprep.mubr.f32.mxu0 0.0
  %942 = vmatmul.mubr.f32.gmra.mxu0 %v361
  %v943 = vpop.f32.mrf.mxu0
  %v944 = vadd.f32 %v151, %v943
  %v945 = vpop.f32.mrf.mxu0
  %946 = vmatprep.mubr.f32.mxu0 0.0
  %947 = vmatmul.mubr.f32.gmra.mxu0 %v364
  %v948 = vpop.f32.mrf.mxu0
  %v949 = vadd.f32 %v151, %v948
  %v950 = vpop.f32.mrf.mxu0
  %951 = vmatprep.mubr.f32.mxu0 0.0
  %952 = vmatmul.mubr.f32.gmra.mxu0 %v367
  %v953 = vpop.f32.mrf.mxu0
  %v954 = vadd.f32 %v151, %v953
  %v955 = vpop.f32.mrf.mxu0
  %956 = vmatprep.mubr.f32.mxu0 0.0
  %957 = vmatmul.mubr.f32.gmra.mxu0 %v370
  %v958 = vpop.f32.mrf.mxu0
  %v959 = vadd.f32 %v151, %v958
  %v960 = vpop.f32.mrf.mxu0
  %961 = vmatprep.mubr.f32.mxu0 0.0
  %962 = vmatmul.mubr.f32.gmra.mxu0 %v373
  %v963 = vpop.f32.mrf.mxu0
  %v964 = vadd.f32 %v151, %v963
  %v965 = vpop.f32.mrf.mxu0
  %966 = vmatprep.mubr.f32.mxu0 0.0
  %967 = vmatmul.mubr.f32.gmra.mxu0 %v376
  %v968 = vpop.f32.mrf.mxu0
  %v969 = vadd.f32 %v151, %v968
  %v970 = vpop.f32.mrf.mxu0
  %971 = vmatprep.mubr.f32.mxu0 0.0
  %972 = vmatmul.mubr.f32.gmra.mxu0 %v379
  %v973 = vpop.f32.mrf.mxu0
  %v974 = vadd.f32 %v151, %v973
  %v975 = vpop.f32.mrf.mxu0
  %976 = vmatprep.mubr.f32.mxu0 0.0
  %977 = vmatmul.mubr.f32.gmra.mxu0 %v382
  %v978 = vpop.f32.mrf.mxu0
  %v979 = vadd.f32 %v151, %v978
  %v980 = vpop.f32.mrf.mxu0
  %981 = vmatprep.mubr.f32.mxu0 0.0
  %982 = vmatmul.mubr.f32.gmra.mxu0 %v385
  %v983 = vpop.f32.mrf.mxu0
  %v984 = vadd.f32 %v151, %v983
  %v985 = vpop.f32.mrf.mxu0
  %986 = vmatprep.mubr.f32.mxu0 0.0
  %987 = vmatmul.mubr.f32.gmra.mxu0 %v388
  %v988 = vpop.f32.mrf.mxu0
  %v989 = vadd.f32 %v151, %v988
  %v990 = vpop.f32.mrf.mxu0
  %991 = vmatprep.mubr.f32.mxu0 0.0
  %992 = vmatmul.mubr.f32.gmra.mxu0 %v391
  %v993 = vpop.f32.mrf.mxu0
  %v994 = vadd.f32 %v151, %v993
  %v995 = vpop.f32.mrf.mxu0
  %996 = vmatprep.mubr.f32.mxu0 0.0
  %997 = vmatmul.mubr.f32.gmra.mxu0 %v394
  %v998 = vpop.f32.mrf.mxu0
  %v999 = vadd.f32 %v151, %v998
  %v1000 = vpop.f32.mrf.mxu0
  %1001 = vmatprep.mubr.f32.mxu0 0.0
  %1002 = vmatmul.mubr.f32.gmra.mxu0 %v397
  %v1003 = vpop.f32.mrf.mxu0
  %v1004 = vadd.f32 %v151, %v1003
  %v1005 = vpop.f32.mrf.mxu0
  %1006 = vmatprep.mubr.f32.mxu0 0.0
  %1007 = vmatmul.mubr.f32.gmra.mxu0 %v400
  %v1008 = vpop.f32.mrf.mxu0
  %v1009 = vadd.f32 %v151, %v1008
  %v1010 = vpop.f32.mrf.mxu0
  %1011 = vmatprep.mubr.f32.mxu0 0.0
  %1012 = vmatmul.mubr.f32.gmra.mxu0 %v403
  %v1013 = vpop.f32.mrf.mxu0
  %v1014 = vadd.f32 %v151, %v1013
  %v1015 = vpop.f32.mrf.mxu0
  %1016 = vmatprep.mubr.f32.mxu0 0.0
  %1017 = vmatmul.mubr.f32.gmra.mxu0 %v406
  %v1018 = vpop.f32.mrf.mxu0
  %v1019 = vadd.f32 %v151, %v1018
  %v1020 = vpop.f32.mrf.mxu0
  %1021 = vmatprep.mubr.f32.mxu0 0.0
  %1022 = vmatmul.mubr.f32.gmra.mxu0 %v409
  %v1023 = vpop.f32.mrf.mxu0
  %v1024 = vadd.f32 %v151, %v1023
  %v1025 = vpop.f32.mrf.mxu0
  %1026 = vmatprep.mubr.f32.mxu0 0.0
  %1027 = vmatmul.mubr.f32.gmra.mxu0 %v412
  %v1028 = vpop.f32.mrf.mxu0
  %v1029 = vadd.f32 %v151, %v1028
  %v1030 = vpop.f32.mrf.mxu0
  %1031 = vmatprep.mubr.f32.mxu0 0.0
  %1032 = vmatmul.mubr.f32.gmra.mxu0 %v415
  %v1033 = vpop.f32.mrf.mxu0
  %v1034 = vadd.f32 %v151, %v1033
  %v1035 = vpop.f32.mrf.mxu0
  %1036 = vmatprep.mubr.f32.mxu0 0.0
  %1037 = vmatmul.mubr.f32.gmra.mxu0 %v418
  %v1038 = vpop.f32.mrf.mxu0
  %v1039 = vadd.f32 %v151, %v1038
  %v1040 = vpop.f32.mrf.mxu0
  %1041 = vmatprep.mubr.f32.mxu0 0.0
  %1042 = vmatmul.mubr.f32.gmra.mxu0 %v421
  %v1043 = vpop.f32.mrf.mxu0
  %v1044 = vadd.f32 %v151, %v1043
  %v1045 = vpop.f32.mrf.mxu0
  %1046 = vmatprep.mubr.f32.mxu0 0.0
  %1047 = vmatmul.mubr.f32.gmra.mxu0 %v424
  %v1048 = vpop.f32.mrf.mxu0
  %v1049 = vadd.f32 %v151, %v1048
  %v1050 = vpop.f32.mrf.mxu0
  %1051 = vmatprep.mubr.f32.mxu0 0.0
  %1052 = vmatmul.mubr.f32.gmra.mxu0 %v427
  %v1053 = vpop.f32.mrf.mxu0
  %v1054 = vadd.f32 %v151, %v1053
  %v1055 = vpop.f32.mrf.mxu0
  %1056 = vmatprep.mubr.f32.mxu0 0.0
  %1057 = vmatmul.mubr.f32.gmra.mxu0 %v430
  %v1058 = vpop.f32.mrf.mxu0
  %v1059 = vadd.f32 %v151, %v1058
  %v1060 = vpop.f32.mrf.mxu0
  %1061 = vmatprep.mubr.f32.mxu0 0.0
  %1062 = vmatmul.mubr.f32.gmra.mxu0 %v433
  %v1063 = vpop.f32.mrf.mxu0
  %v1064 = vadd.f32 %v151, %v1063
  %v1065 = vpop.f32.mrf.mxu0
  %1066 = vmatprep.mubr.f32.mxu0 0.0
  %1067 = vmatmul.mubr.f32.gmra.mxu0 %v436
  %v1068 = vpop.f32.mrf.mxu0
  %v1069 = vadd.f32 %v151, %v1068
  %v1070 = vpop.f32.mrf.mxu0
  %1071 = vmatprep.mubr.f32.mxu0 0.0
  %1072 = vmatmul.mubr.f32.gmra.mxu0 %v439
  %v1073 = vpop.f32.mrf.mxu0
  %v1074 = vadd.f32 %v151, %v1073
  %v1075 = vpop.f32.mrf.mxu0
  %1076 = vmatprep.mubr.f32.mxu0 0.0
  %1077 = vmatmul.mubr.f32.gmra.mxu0 %v442
  %v1078 = vpop.f32.mrf.mxu0
  %v1079 = vadd.f32 %v151, %v1078
  %v1080 = vpop.f32.mrf.mxu0
  %1081 = vmatprep.mubr.f32.mxu0 0.0
  %1082 = vmatmul.mubr.f32.gmra.mxu0 %v445
  %v1083 = vpop.f32.mrf.mxu0
  %v1084 = vadd.f32 %v151, %v1083
  %v1085 = vpop.f32.mrf.mxu0
  %1086 = vmatprep.mubr.f32.mxu0 0.0
  %1087 = vmatmul.mubr.f32.gmra.mxu0 %v448
  %v1088 = vpop.f32.mrf.mxu0
  %v1089 = vadd.f32 %v151, %v1088
  %v1090 = vpop.f32.mrf.mxu0
  %1091 = vmatprep.mubr.f32.mxu0 0.0
  %1092 = vmatmul.mubr.f32.gmra.mxu0 %v451
  %v1093 = vpop.f32.mrf.mxu0
  %v1094 = vadd.f32 %v151, %v1093
  %v1095 = vpop.f32.mrf.mxu0
  %1096 = vmatprep.mubr.f32.mxu0 0.0
  %1097 = vmatmul.mubr.f32.gmra.mxu0 %v454
  %v1098 = vpop.f32.mrf.mxu0
  %v1099 = vadd.f32 %v151, %v1098
  %v1100 = vpop.f32.mrf.mxu0
  %1101 = vmatprep.mubr.f32.mxu0 0.0
  %1102 = vmatmul.mubr.f32.gmra.mxu0 %v457
  %v1103 = vpop.f32.mrf.mxu0
  %v1104 = vadd.f32 %v151, %v1103
  %v1105 = vpop.f32.mrf.mxu0
  %1106 = vmatprep.mubr.f32.mxu0 0.0
  %1107 = vmatmul.mubr.f32.gmra.mxu0 %v460
  %v1108 = vpop.f32.mrf.mxu0
  %v1109 = vadd.f32 %v151, %v1108
  %v1110 = vpop.f32.mrf.mxu0
  %1111 = vmatprep.mubr.f32.mxu0 0.0
  %1112 = vmatmul.mubr.f32.gmra.mxu0 %v463
  %v1113 = vpop.f32.mrf.mxu0
  %v1114 = vadd.f32 %v151, %v1113
  %v1115 = vpop.f32.mrf.mxu0
  %1116 = vmatprep.mubr.f32.mxu0 0.0
  %1117 = vmatmul.mubr.f32.gmra.mxu0 %v466
  %v1118 = vpop.f32.mrf.mxu0
  %v1119 = vadd.f32 %v151, %v1118
  %v1120 = vpop.f32.mrf.mxu0
  %1121 = vmatprep.mubr.f32.mxu0 0.0
  %1122 = vmatmul.mubr.f32.gmra.mxu0 %v469
  %v1123 = vpop.f32.mrf.mxu0
  %v1124 = vadd.f32 %v151, %v1123
  %v1125 = vpop.f32.mrf.mxu0
  %1126 = vmatprep.mubr.f32.mxu0 0.0
  %1127 = vmatmul.mubr.f32.gmra.mxu0 %v472
  %v1128 = vpop.f32.mrf.mxu0
  %v1129 = vadd.f32 %v151, %v1128
  %v1130 = vpop.f32.mrf.mxu0
  %1131 = vmatprep.mubr.f32.mxu0 0.0
  %1132 = vmatmul.mubr.f32.gmra.mxu0 %v475
  %v1133 = vpop.f32.mrf.mxu0
  %v1134 = vadd.f32 %v151, %v1133
  %v1135 = vpop.f32.mrf.mxu0
  %1136 = vmatprep.mubr.f32.mxu0 0.0
  %1137 = vmatmul.mubr.f32.gmra.mxu0 %v478
  %v1138 = vpop.f32.mrf.mxu0
  %v1139 = vadd.f32 %v151, %v1138
  %v1140 = vpop.f32.mrf.mxu0
  %1141 = vmatprep.mubr.f32.mxu0 0.0
  %1142 = vmatmul.mubr.f32.gmra.mxu0 %v481
  %v1143 = vpop.f32.mrf.mxu0
  %v1144 = vadd.f32 %v151, %v1143
  %v1145 = vpop.f32.mrf.mxu0
  %1146 = vmatprep.mubr.f32.mxu0 0.0
  %1147 = vmatmul.mubr.f32.gmra.mxu0 %v484
  %v1148 = vpop.f32.mrf.mxu0
  %v1149 = vadd.f32 %v151, %v1148
  %v1150 = vpop.f32.mrf.mxu0
  %1151 = vmatprep.mubr.f32.mxu0 0.0
  %1152 = vmatmul.mubr.f32.gmra.mxu0 %v487
  %v1153 = vpop.f32.mrf.mxu0
  %v1154 = vadd.f32 %v151, %v1153
  %v1155 = vpop.f32.mrf.mxu0
  %1156 = vmatprep.mubr.f32.mxu0 0.0
  %1157 = vmatmul.mubr.f32.gmra.mxu0 %v490
  %v1158 = vpop.f32.mrf.mxu0
  %v1159 = vadd.f32 %v151, %v1158
  %v1160 = vpop.f32.mrf.mxu0
  %1161 = vmatprep.mubr.f32.mxu0 0.0
  %1162 = vmatmul.mubr.f32.gmra.mxu0 %v493
  %v1163 = vpop.f32.mrf.mxu0
  %v1164 = vadd.f32 %v151, %v1163
  %v1165 = vpop.f32.mrf.mxu0
  %1166 = vmatprep.mubr.f32.mxu0 0.0
  %1167 = vmatmul.mubr.f32.gmra.mxu0 %v496
  %v1168 = vpop.f32.mrf.mxu0
  %v1169 = vadd.f32 %v151, %v1168
  %v1170 = vpop.f32.mrf.mxu0
  %1171 = vmatprep.mubr.f32.mxu0 0.0
  %1172 = vmatmul.mubr.f32.gmra.mxu0 %v499
  %v1173 = vpop.f32.mrf.mxu0
  %v1174 = vadd.f32 %v151, %v1173
  %v1175 = vpop.f32.mrf.mxu0
  %1176 = vmatprep.mubr.f32.mxu0 0.0
  %1177 = vmatmul.mubr.f32.gmra.mxu0 %v502
  %v1178 = vpop.f32.mrf.mxu0
  %v1179 = vadd.f32 %v151, %v1178
  %v1180 = vpop.f32.mrf.mxu0
  %1181 = vmatprep.mubr.f32.mxu0 0.0
  %1182 = vmatmul.mubr.f32.gmra.mxu0 %v505
  %v1183 = vpop.f32.mrf.mxu0
  %v1184 = vadd.f32 %v151, %v1183
  %v1185 = vpop.f32.mrf.mxu0
  %1186 = vmatprep.mubr.f32.mxu0 0.0
  %1187 = vmatmul.mubr.f32.gmra.mxu0 %v508
  %v1188 = vpop.f32.mrf.mxu0
  %v1189 = vadd.f32 %v151, %v1188
  %v1190 = vpop.f32.mrf.mxu0
  %1191 = vmatprep.mubr.f32.mxu0 0.0
  %1192 = vmatmul.mubr.f32.gmra.mxu0 %v511
  %v1193 = vpop.f32.mrf.mxu0
  %v1194 = vadd.f32 %v151, %v1193
  %v1195 = vpop.f32.mrf.mxu0
  %1196 = vmatprep.mubr.f32.mxu0 0.0
  %1197 = vmatmul.mubr.f32.gmra.mxu0 %v514
  %v1198 = vpop.f32.mrf.mxu0
  %v1199 = vadd.f32 %v151, %v1198
  %v1200 = vpop.f32.mrf.mxu0
  %1201 = vmatprep.mubr.f32.mxu0 0.0
  %1202 = vmatmul.mubr.f32.gmra.mxu0 %v517
  %v1203 = vpop.f32.mrf.mxu0
  %v1204 = vadd.f32 %v151, %v1203
  %v1205 = vpop.f32.mrf.mxu0
  %1206 = vmatprep.mubr.f32.mxu0 0.0
  %1207 = vmatmul.mubr.f32.gmra.mxu0 %v520
  %v1208 = vpop.f32.mrf.mxu0
  %v1209 = vadd.f32 %v151, %v1208
  %v1210 = vpop.f32.mrf.mxu0
  %1211 = vmatprep.mubr.f32.mxu0 0.0
  %1212 = vmatmul.mubr.f32.gmra.mxu0 %v523
  %v1213 = vpop.f32.mrf.mxu0
  %v1214 = vadd.f32 %v151, %v1213
  %v1215 = vpop.f32.mrf.mxu0
  %1216 = vmatprep.mubr.f32.mxu0 0.0
  %1217 = vmatmul.mubr.f32.gmra.mxu0 %v526
  %v1218 = vpop.f32.mrf.mxu0
  %v1219 = vadd.f32 %v151, %v1218
  %v1220 = vpop.f32.mrf.mxu0
  %1221 = vdwg.mxu0
  %v1222 = vtanh.pop %v599
  %v1223 = vtanh.pop %v604
  %v1224 = vtanh.pop %v609
  %v1225 = vtanh.pop %v614
  %v1226 = vtanh.pop %v619
  %v1227 = vtanh.pop %v624
  %v1228 = vtanh.pop %v629
  %v1229 = vtanh.pop %v634
  %v1230 = vtanh.pop %v639
  %v1231 = vtanh.pop %v644
  %v1232 = vtanh.pop %v649
  %v1233 = vtanh.pop %v654
  %v1234 = vtanh.pop %v659
  %v1235 = vtanh.pop %v664
  %v1236 = vtanh.pop %v669
  %v1237 = vtanh.pop %v674
  %v1238 = vtanh.pop %v679
  %v1239 = vtanh.pop %v684
  %v1240 = vtanh.pop %v689
  %v1241 = vtanh.pop %v694
  %v1242 = vtanh.pop %v699
  %v1243 = vtanh.pop %v704
  %v1244 = vtanh.pop %v709
  %v1245 = vtanh.pop %v714
  %v1246 = vtanh.pop %v719
  %v1247 = vtanh.pop %v724
  %v1248 = vtanh.pop %v729
  %v1249 = vtanh.pop %v734
  %v1250 = vtanh.pop %v739
  %v1251 = vtanh.pop %v744
  %v1252 = vtanh.pop %v749
  %v1253 = vtanh.pop %v754
  %v1254 = vtanh.pop %v759
  %v1255 = vtanh.pop %v764
  %v1256 = vtanh.pop %v769
  %v1257 = vtanh.pop %v774
  %v1258 = vtanh.pop %v779
  %v1259 = vtanh.pop %v784
  %v1260 = vtanh.pop %v789
  %v1261 = vtanh.pop %v794
  %v1262 = vtanh.pop %v799
  %v1263 = vtanh.pop %v804
  %v1264 = vtanh.pop %v809
  %v1265 = vtanh.pop %v814
  %v1266 = vtanh.pop %v819
  %v1267 = vtanh.pop %v824
  %v1268 = vtanh.pop %v829
  %v1269 = vtanh.pop %v834
  %v1270 = vtanh.pop %v839
  %v1271 = vtanh.pop %v844
  %v1272 = vtanh.pop %v849
  %v1273 = vtanh.pop %v854
  %v1274 = vtanh.pop %v859
  %v1275 = vtanh.pop %v864
  %v1276 = vtanh.pop %v869
  %v1277 = vtanh.pop %v874
  %v1278 = vtanh.pop %v879
  %v1279 = vtanh.pop %v884
  %v1280 = vtanh.pop %v889
  %v1281 = vtanh.pop %v894
  %v1282 = vtanh.pop %v899
  %v1283 = vtanh.pop %v904
  %v1284 = vtanh.pop %v909
  %v1285 = vtanh.pop %v914
  %v1286 = vtanh.pop %v919
  %v1287 = vtanh.pop %v924
  %v1288 = vtanh.pop %v929
  %v1289 = vtanh.pop %v934
  %v1290 = vtanh.pop %v939
  %v1291 = vtanh.pop %v944
  %v1292 = vtanh.pop %v949
  %v1293 = vtanh.pop %v954
  %v1294 = vtanh.pop %v959
  %v1295 = vtanh.pop %v964
  %v1296 = vtanh.pop %v969
  %v1297 = vtanh.pop %v974
  %v1298 = vtanh.pop %v979
  %v1299 = vtanh.pop %v984
  %v1300 = vtanh.pop %v989
  %v1301 = vtanh.pop %v994
  %v1302 = vtanh.pop %v999
  %v1303 = vtanh.pop %v1004
  %v1304 = vtanh.pop %v1009
  %v1305 = vtanh.pop %v1014
  %v1306 = vtanh.pop %v1019
  %v1307 = vtanh.pop %v1024
  %v1308 = vtanh.pop %v1029
  %v1309 = vtanh.pop %v1034
  %v1310 = vtanh.pop %v1039
  %v1311 = vtanh.pop %v1044
  %v1312 = vtanh.pop %v1049
  %v1313 = vtanh.pop %v1054
  %v1314 = vtanh.pop %v1059
  %v1315 = vtanh.pop %v1064
  %v1316 = vtanh.pop %v1069
  %v1317 = vtanh.pop %v1074
  %v1318 = vtanh.pop %v1079
  %v1319 = vtanh.pop %v1084
  %v1320 = vtanh.pop %v1089
  %v1321 = vtanh.pop %v1094
  %v1322 = vtanh.pop %v1099
  %v1323 = vtanh.pop %v1104
  %v1324 = vtanh.pop %v1109
  %v1325 = vtanh.pop %v1114
  %v1326 = vtanh.pop %v1119
  %v1327 = vtanh.pop %v1124
  %v1328 = vtanh.pop %v1129
  %v1329 = vtanh.pop %v1134
  %v1330 = vtanh.pop %v1139
  %v1331 = vtanh.pop %v1144
  %v1332 = vtanh.pop %v1149
  %v1333 = vtanh.pop %v1154
  %v1334 = vtanh.pop %v1159
  %v1335 = vtanh.pop %v1164
  %v1336 = vtanh.pop %v1169
  %v1337 = vtanh.pop %v1174
  %v1338 = vtanh.pop %v1179
  %v1339 = vtanh.pop %v1184
  %v1340 = vtanh.pop %v1189
  %v1341 = vtanh.pop %v1194
  %v1342 = vtanh.pop %v1199
  %v1343 = vtanh.pop %v1204
  %v1344 = vtanh.pop %v1209
  %v1345 = vtanh.pop %v1214
  %v1346 = vtanh.pop %v1219
  %v1347 = vld [vmem:[%s1] sm:$0xff]
  %v1348 = vld [vmem:[%s1 + $0x8] sm:$0xff]
  %v1349 = vld [vmem:[%s1 + $0x10] sm:$0xff]
  %v1350 = vld [vmem:[%s1 + $0x18] sm:$0xff]
  %v1351 = vld [vmem:[%s1 + $0x20] sm:$0xff]
  %v1352 = vld [vmem:[%s1 + $0x28] sm:$0xff]
  %v1353 = vld [vmem:[%s1 + $0x30] sm:$0xff]
  %v1354 = vld [vmem:[%s1 + $0x38] sm:$0xff]
  %v1355 = vlaneseq
  %v1356 = vshrl.u32 %v1355, 7
  %v1357 = vsub.s32 0, %v1356
  %v1358 = vrot.slane %v143, %v1357
  %vm1359 = vcmask 523264
  %v1361 = vsel %vm1359, %v1222, 0
  %v1364 = vsel %vm1359, %v1223, 0
  %v1367 = vsel %vm1359, %v1224, 0
  %v1370 = vsel %vm1359, %v1225, 0
  %v1373 = vsel %vm1359, %v1226, 0
  %v1376 = vsel %vm1359, %v1227, 0
  %v1379 = vsel %vm1359, %v1228, 0
  %v1382 = vsel %vm1359, %v1229, 0
  %v1385 = vsel %vm1359, %v1230, 0
  %v1388 = vsel %vm1359, %v1231, 0
  %v1391 = vsel %vm1359, %v1232, 0
  %v1394 = vsel %vm1359, %v1233, 0
  %v1397 = vsel %vm1359, %v1234, 0
  %v1400 = vsel %vm1359, %v1235, 0
  %v1403 = vsel %vm1359, %v1236, 0
  %v1406 = vsel %vm1359, %v1237, 0
  %v1409 = vsel %vm1359, %v1238, 0
  %v1412 = vsel %vm1359, %v1239, 0
  %v1415 = vsel %vm1359, %v1240, 0
  %v1418 = vsel %vm1359, %v1241, 0
  %v1421 = vsel %vm1359, %v1242, 0
  %v1424 = vsel %vm1359, %v1243, 0
  %v1427 = vsel %vm1359, %v1244, 0
  %v1430 = vsel %vm1359, %v1245, 0
  %v1433 = vsel %vm1359, %v1246, 0
  %v1436 = vsel %vm1359, %v1247, 0
  %v1439 = vsel %vm1359, %v1248, 0
  %v1442 = vsel %vm1359, %v1249, 0
  %v1445 = vsel %vm1359, %v1250, 0
  %v1448 = vsel %vm1359, %v1251, 0
  %v1451 = vsel %vm1359, %v1252, 0
  %v1454 = vsel %vm1359, %v1253, 0
  %v1457 = vsel %vm1359, %v1254, 0
  %v1460 = vsel %vm1359, %v1255, 0
  %v1463 = vsel %vm1359, %v1256, 0
  %v1466 = vsel %vm1359, %v1257, 0
  %v1469 = vsel %vm1359, %v1258, 0
  %v1472 = vsel %vm1359, %v1259, 0
  %v1475 = vsel %vm1359, %v1260, 0
  %v1478 = vsel %vm1359, %v1261, 0
  %v1481 = vsel %vm1359, %v1262, 0
  %v1484 = vsel %vm1359, %v1263, 0
  %v1487 = vsel %vm1359, %v1264, 0
  %v1490 = vsel %vm1359, %v1265, 0
  %v1493 = vsel %vm1359, %v1266, 0
  %v1496 = vsel %vm1359, %v1267, 0
  %v1499 = vsel %vm1359, %v1268, 0
  %v1502 = vsel %vm1359, %v1269, 0
  %v1505 = vsel %vm1359, %v1270, 0
  %v1508 = vsel %vm1359, %v1271, 0
  %v1511 = vsel %vm1359, %v1272, 0
  %v1514 = vsel %vm1359, %v1273, 0
  %v1517 = vsel %vm1359, %v1274, 0
  %v1520 = vsel %vm1359, %v1275, 0
  %v1523 = vsel %vm1359, %v1276, 0
  %v1526 = vsel %vm1359, %v1277, 0
  %v1529 = vsel %vm1359, %v1278, 0
  %v1532 = vsel %vm1359, %v1279, 0
  %v1535 = vsel %vm1359, %v1280, 0
  %v1538 = vsel %vm1359, %v1281, 0
  %v1541 = vsel %vm1359, %v1282, 0
  %v1544 = vsel %vm1359, %v1283, 0
  %v1547 = vsel %vm1359, %v1284, 0
  %v1550 = vsel %vm1359, %v1285, 0
  %v1553 = vsel %vm1359, %v1286, 0
  %v1556 = vsel %vm1359, %v1287, 0
  %v1559 = vsel %vm1359, %v1288, 0
  %v1562 = vsel %vm1359, %v1289, 0
  %v1565 = vsel %vm1359, %v1290, 0
  %v1568 = vsel %vm1359, %v1291, 0
  %v1571 = vsel %vm1359, %v1292, 0
  %v1574 = vsel %vm1359, %v1293, 0
  %v1577 = vsel %vm1359, %v1294, 0
  %v1580 = vsel %vm1359, %v1295, 0
  %v1583 = vsel %vm1359, %v1296, 0
  %v1586 = vsel %vm1359, %v1297, 0
  %v1589 = vsel %vm1359, %v1298, 0
  %v1592 = vsel %vm1359, %v1299, 0
  %v1595 = vsel %vm1359, %v1300, 0
  %v1598 = vsel %vm1359, %v1301, 0
  %v1601 = vsel %vm1359, %v1302, 0
  %v1604 = vsel %vm1359, %v1303, 0
  %v1607 = vsel %vm1359, %v1304, 0
  %v1610 = vsel %vm1359, %v1305, 0
  %v1613 = vsel %vm1359, %v1306, 0
  %v1616 = vsel %vm1359, %v1307, 0
  %v1619 = vsel %vm1359, %v1308, 0
  %v1622 = vsel %vm1359, %v1309, 0
  %v1625 = vsel %vm1359, %v1310, 0
  %v1628 = vsel %vm1359, %v1311, 0
  %v1631 = vsel %vm1359, %v1312, 0
  %v1634 = vsel %vm1359, %v1313, 0
  %v1637 = vsel %vm1359, %v1314, 0
  %v1640 = vsel %vm1359, %v1315, 0
  %v1643 = vsel %vm1359, %v1316, 0
  %v1646 = vsel %vm1359, %v1317, 0
  %v1649 = vsel %vm1359, %v1318, 0
  %v1652 = vsel %vm1359, %v1319, 0
  %v1655 = vsel %vm1359, %v1320, 0
  %v1658 = vsel %vm1359, %v1321, 0
  %v1661 = vsel %vm1359, %v1322, 0
  %v1664 = vsel %vm1359, %v1323, 0
  %v1667 = vsel %vm1359, %v1324, 0
  %v1670 = vsel %vm1359, %v1325, 0
  %v1673 = vsel %vm1359, %v1326, 0
  %v1676 = vsel %vm1359, %v1327, 0
  %v1679 = vsel %vm1359, %v1328, 0
  %v1682 = vsel %vm1359, %v1329, 0
  %v1685 = vsel %vm1359, %v1330, 0
  %v1688 = vsel %vm1359, %v1331, 0
  %v1691 = vsel %vm1359, %v1332, 0
  %v1694 = vsel %vm1359, %v1333, 0
  %v1697 = vsel %vm1359, %v1334, 0
  %v1700 = vsel %vm1359, %v1335, 0
  %v1703 = vsel %vm1359, %v1336, 0
  %v1706 = vsel %vm1359, %v1337, 0
  %v1709 = vsel %vm1359, %v1338, 0
  %v1712 = vsel %vm1359, %v1339, 0
  %v1715 = vsel %vm1359, %v1340, 0
  %v1718 = vsel %vm1359, %v1341, 0
  %v1721 = vsel %vm1359, %v1342, 0
  %v1724 = vsel %vm1359, %v1343, 0
  %v1727 = vsel %vm1359, %v1344, 0
  %v1730 = vsel %vm1359, %v1345, 0
  %v1733 = vsel %vm1359, %v1346, 0
  %1735 = vmatprep.subr.mxu0 0.0
  %1736 = vmatpush1.msra.mxu0 0.0
  %1737 = vmatprep.subr.mxu0 0.0
  %1738 = vmatpush1.msra.mxu0 0.0
  %1739 = vmatprep.subr.mxu0 0.0
  %1740 = vmatpush1.msra.mxu0 0.0
  %1741 = vmatprep.subr.mxu0 0.0
  %1742 = vmatpush1.msra.mxu0 0.0
  %1743 = vmatprep.subr.mxu0 0.0
  %1744 = vmatpush1.msra.mxu0 0.0
  %1745 = vmatprep.subr.mxu0 0.0
  %1746 = vmatpush1.msra.mxu0 0.0
  %1747 = vmatprep.subr.mxu0 0.0
  %1748 = vmatpush1.msra.mxu0 0.0
  %1749 = vmatprep.subr.mxu0 0.0
  %1750 = vmatpush1.msra.mxu0 0.0
  %1751 = vmatprep.subr.mxu0 0.0
  %1752 = vmatpush1.msra.mxu0 %v1354
  %1753 = vmatprep.subr.mxu0 0.0
  %1754 = vmatpush1.msra.mxu0 %v1353
  %1755 = vmatprep.subr.mxu0 0.0
  %1756 = vmatpush1.msra.mxu0 %v1352
  %1757 = vmatprep.subr.mxu0 0.0
  %1758 = vmatpush1.msra.mxu0 %v1351
  %1759 = vmatprep.subr.mxu0 0.0
  %1760 = vmatpush1.msra.mxu0 %v1350
  %1761 = vmatprep.subr.mxu0 0.0
  %1762 = vmatpush1.msra.mxu0 %v1349
  %1763 = vmatprep.subr.mxu0 0.0
  %1764 = vmatpush1.msra.mxu0 %v1348
  %1765 = vmatprep.subr.mxu0 0.0
  %1766 = vmatpush1.msra.mxu0 %v1347
  %1767 = vmatprep.subr.mxu0 0.0
  %1768 = vmatpush2.msra.mxu0 0.0
  %1769 = vmatprep.subr.mxu0 0.0
  %1770 = vmatpush2.msra.mxu0 0.0
  %1771 = vmatprep.subr.mxu0 0.0
  %1772 = vmatpush2.msra.mxu0 0.0
  %1773 = vmatprep.subr.mxu0 0.0
  %1774 = vmatpush2.msra.mxu0 0.0
  %1775 = vmatprep.subr.mxu0 0.0
  %1776 = vmatpush2.msra.mxu0 0.0
  %1777 = vmatprep.subr.mxu0 0.0
  %1778 = vmatpush2.msra.mxu0 0.0
  %1779 = vmatprep.subr.mxu0 0.0
  %1780 = vmatpush2.msra.mxu0 0.0
  %1781 = vmatprep.subr.mxu0 0.0
  %1782 = vmatpush2.msra.mxu0 0.0
  %1783 = vmatprep.subr.mxu0 0.0
  %1784 = vmatpush2.msra.mxu0 0.0
  %1785 = vmatprep.subr.mxu0 0.0
  %1786 = vmatpush2.msra.mxu0 0.0
  %1787 = vmatprep.subr.mxu0 0.0
  %1788 = vmatpush2.msra.mxu0 0.0
  %1789 = vmatprep.subr.mxu0 0.0
  %1790 = vmatpush2.msra.mxu0 0.0
  %1791 = vmatprep.subr.mxu0 0.0
  %1792 = vmatpush2.msra.mxu0 0.0
  %1793 = vmatprep.subr.mxu0 0.0
  %1794 = vmatpush2.msra.mxu0 0.0
  %1795 = vmatprep.subr.mxu0 0.0
  %1796 = vmatpush2.msra.mxu0 0.0
  %1797 = vmatprep.subr.mxu0 0.0
  %1798 = vmatpush2.msra.mxu0 0.0
  %1799 = vmatprep.mubr.f32.mxu0 0.0
  %1800 = vmatmul.mubr.f32.gmra.mxu0 %v1361
  %v1801 = vpop.f32.mrf.mxu0
  %v1802 = vadd.f32 %v1358, %v1801
  %v1803 = vpop.f32.mrf.mxu0
  %1804 = vmatprep.mubr.f32.mxu0 0.0
  %1805 = vmatmul.mubr.f32.gmra.mxu0 %v1364
  %v1806 = vpop.f32.mrf.mxu0
  %v1807 = vadd.f32 %v1358, %v1806
  %v1808 = vpop.f32.mrf.mxu0
  %1809 = vmatprep.mubr.f32.mxu0 0.0
  %1810 = vmatmul.mubr.f32.gmra.mxu0 %v1367
  %v1811 = vpop.f32.mrf.mxu0
  %v1812 = vadd.f32 %v1358, %v1811
  %v1813 = vpop.f32.mrf.mxu0
  %1814 = vmatprep.mubr.f32.mxu0 0.0
  %1815 = vmatmul.mubr.f32.gmra.mxu0 %v1370
  %v1816 = vpop.f32.mrf.mxu0
  %v1817 = vadd.f32 %v1358, %v1816
  %v1818 = vpop.f32.mrf.mxu0
  %1819 = vmatprep.mubr.f32.mxu0 0.0
  %1820 = vmatmul.mubr.f32.gmra.mxu0 %v1373
  %v1821 = vpop.f32.mrf.mxu0
  %v1822 = vadd.f32 %v1358, %v1821
  %v1823 = vpop.f32.mrf.mxu0
  %1824 = vmatprep.mubr.f32.mxu0 0.0
  %1825 = vmatmul.mubr.f32.gmra.mxu0 %v1376
  %v1826 = vpop.f32.mrf.mxu0
  %v1827 = vadd.f32 %v1358, %v1826
  %v1828 = vpop.f32.mrf.mxu0
  %1829 = vmatprep.mubr.f32.mxu0 0.0
  %1830 = vmatmul.mubr.f32.gmra.mxu0 %v1379
  %v1831 = vpop.f32.mrf.mxu0
  %v1832 = vadd.f32 %v1358, %v1831
  %v1833 = vpop.f32.mrf.mxu0
  %1834 = vmatprep.mubr.f32.mxu0 0.0
  %1835 = vmatmul.mubr.f32.gmra.mxu0 %v1382
  %v1836 = vpop.f32.mrf.mxu0
  %v1837 = vadd.f32 %v1358, %v1836
  %v1838 = vpop.f32.mrf.mxu0
  %1839 = vmatprep.mubr.f32.mxu0 0.0
  %1840 = vmatmul.mubr.f32.gmra.mxu0 %v1385
  %v1841 = vpop.f32.mrf.mxu0
  %v1842 = vadd.f32 %v1358, %v1841
  %v1843 = vpop.f32.mrf.mxu0
  %1844 = vmatprep.mubr.f32.mxu0 0.0
  %1845 = vmatmul.mubr.f32.gmra.mxu0 %v1388
  %v1846 = vpop.f32.mrf.mxu0
  %v1847 = vadd.f32 %v1358, %v1846
  %v1848 = vpop.f32.mrf.mxu0
  %1849 = vmatprep.mubr.f32.mxu0 0.0
  %1850 = vmatmul.mubr.f32.gmra.mxu0 %v1391
  %v1851 = vpop.f32.mrf.mxu0
  %v1852 = vadd.f32 %v1358, %v1851
  %v1853 = vpop.f32.mrf.mxu0
  %1854 = vmatprep.mubr.f32.mxu0 0.0
  %1855 = vmatmul.mubr.f32.gmra.mxu0 %v1394
  %v1856 = vpop.f32.mrf.mxu0
  %v1857 = vadd.f32 %v1358, %v1856
  %v1858 = vpop.f32.mrf.mxu0
  %1859 = vmatprep.mubr.f32.mxu0 0.0
  %1860 = vmatmul.mubr.f32.gmra.mxu0 %v1397
  %v1861 = vpop.f32.mrf.mxu0
  %v1862 = vadd.f32 %v1358, %v1861
  %v1863 = vpop.f32.mrf.mxu0
  %1864 = vmatprep.mubr.f32.mxu0 0.0
  %1865 = vmatmul.mubr.f32.gmra.mxu0 %v1400
  %v1866 = vpop.f32.mrf.mxu0
  %v1867 = vadd.f32 %v1358, %v1866
  %v1868 = vpop.f32.mrf.mxu0
  %1869 = vmatprep.mubr.f32.mxu0 0.0
  %1870 = vmatmul.mubr.f32.gmra.mxu0 %v1403
  %v1871 = vpop.f32.mrf.mxu0
  %v1872 = vadd.f32 %v1358, %v1871
  %v1873 = vpop.f32.mrf.mxu0
  %1874 = vmatprep.mubr.f32.mxu0 0.0
  %1875 = vmatmul.mubr.f32.gmra.mxu0 %v1406
  %v1876 = vpop.f32.mrf.mxu0
  %v1877 = vadd.f32 %v1358, %v1876
  %v1878 = vpop.f32.mrf.mxu0
  %1879 = vmatprep.mubr.f32.mxu0 0.0
  %1880 = vmatmul.mubr.f32.gmra.mxu0 %v1409
  %v1881 = vpop.f32.mrf.mxu0
  %v1882 = vadd.f32 %v1358, %v1881
  %v1883 = vpop.f32.mrf.mxu0
  %1884 = vmatprep.mubr.f32.mxu0 0.0
  %1885 = vmatmul.mubr.f32.gmra.mxu0 %v1412
  %v1886 = vpop.f32.mrf.mxu0
  %v1887 = vadd.f32 %v1358, %v1886
  %v1888 = vpop.f32.mrf.mxu0
  %1889 = vmatprep.mubr.f32.mxu0 0.0
  %1890 = vmatmul.mubr.f32.gmra.mxu0 %v1415
  %v1891 = vpop.f32.mrf.mxu0
  %v1892 = vadd.f32 %v1358, %v1891
  %v1893 = vpop.f32.mrf.mxu0
  %1894 = vmatprep.mubr.f32.mxu0 0.0
  %1895 = vmatmul.mubr.f32.gmra.mxu0 %v1418
  %v1896 = vpop.f32.mrf.mxu0
  %v1897 = vadd.f32 %v1358, %v1896
  %v1898 = vpop.f32.mrf.mxu0
  %1899 = vmatprep.mubr.f32.mxu0 0.0
  %1900 = vmatmul.mubr.f32.gmra.mxu0 %v1421
  %v1901 = vpop.f32.mrf.mxu0
  %v1902 = vadd.f32 %v1358, %v1901
  %v1903 = vpop.f32.mrf.mxu0
  %1904 = vmatprep.mubr.f32.mxu0 0.0
  %1905 = vmatmul.mubr.f32.gmra.mxu0 %v1424
  %v1906 = vpop.f32.mrf.mxu0
  %v1907 = vadd.f32 %v1358, %v1906
  %v1908 = vpop.f32.mrf.mxu0
  %1909 = vmatprep.mubr.f32.mxu0 0.0
  %1910 = vmatmul.mubr.f32.gmra.mxu0 %v1427
  %v1911 = vpop.f32.mrf.mxu0
  %v1912 = vadd.f32 %v1358, %v1911
  %v1913 = vpop.f32.mrf.mxu0
  %1914 = vmatprep.mubr.f32.mxu0 0.0
  %1915 = vmatmul.mubr.f32.gmra.mxu0 %v1430
  %v1916 = vpop.f32.mrf.mxu0
  %v1917 = vadd.f32 %v1358, %v1916
  %v1918 = vpop.f32.mrf.mxu0
  %1919 = vmatprep.mubr.f32.mxu0 0.0
  %1920 = vmatmul.mubr.f32.gmra.mxu0 %v1433
  %v1921 = vpop.f32.mrf.mxu0
  %v1922 = vadd.f32 %v1358, %v1921
  %v1923 = vpop.f32.mrf.mxu0
  %1924 = vmatprep.mubr.f32.mxu0 0.0
  %1925 = vmatmul.mubr.f32.gmra.mxu0 %v1436
  %v1926 = vpop.f32.mrf.mxu0
  %v1927 = vadd.f32 %v1358, %v1926
  %v1928 = vpop.f32.mrf.mxu0
  %1929 = vmatprep.mubr.f32.mxu0 0.0
  %1930 = vmatmul.mubr.f32.gmra.mxu0 %v1439
  %v1931 = vpop.f32.mrf.mxu0
  %v1932 = vadd.f32 %v1358, %v1931
  %v1933 = vpop.f32.mrf.mxu0
  %1934 = vmatprep.mubr.f32.mxu0 0.0
  %1935 = vmatmul.mubr.f32.gmra.mxu0 %v1442
  %v1936 = vpop.f32.mrf.mxu0
  %v1937 = vadd.f32 %v1358, %v1936
  %v1938 = vpop.f32.mrf.mxu0
  %1939 = vmatprep.mubr.f32.mxu0 0.0
  %1940 = vmatmul.mubr.f32.gmra.mxu0 %v1445
  %v1941 = vpop.f32.mrf.mxu0
  %v1942 = vadd.f32 %v1358, %v1941
  %v1943 = vpop.f32.mrf.mxu0
  %1944 = vmatprep.mubr.f32.mxu0 0.0
  %1945 = vmatmul.mubr.f32.gmra.mxu0 %v1448
  %v1946 = vpop.f32.mrf.mxu0
  %v1947 = vadd.f32 %v1358, %v1946
  %v1948 = vpop.f32.mrf.mxu0
  %1949 = vmatprep.mubr.f32.mxu0 0.0
  %1950 = vmatmul.mubr.f32.gmra.mxu0 %v1451
  %v1951 = vpop.f32.mrf.mxu0
  %v1952 = vadd.f32 %v1358, %v1951
  %v1953 = vpop.f32.mrf.mxu0
  %1954 = vmatprep.mubr.f32.mxu0 0.0
  %1955 = vmatmul.mubr.f32.gmra.mxu0 %v1454
  %v1956 = vpop.f32.mrf.mxu0
  %v1957 = vadd.f32 %v1358, %v1956
  %v1958 = vpop.f32.mrf.mxu0
  %1959 = vmatprep.mubr.f32.mxu0 0.0
  %1960 = vmatmul.mubr.f32.gmra.mxu0 %v1457
  %v1961 = vpop.f32.mrf.mxu0
  %v1962 = vadd.f32 %v1358, %v1961
  %v1963 = vpop.f32.mrf.mxu0
  %1964 = vmatprep.mubr.f32.mxu0 0.0
  %1965 = vmatmul.mubr.f32.gmra.mxu0 %v1460
  %v1966 = vpop.f32.mrf.mxu0
  %v1967 = vadd.f32 %v1358, %v1966
  %v1968 = vpop.f32.mrf.mxu0
  %1969 = vmatprep.mubr.f32.mxu0 0.0
  %1970 = vmatmul.mubr.f32.gmra.mxu0 %v1463
  %v1971 = vpop.f32.mrf.mxu0
  %v1972 = vadd.f32 %v1358, %v1971
  %v1973 = vpop.f32.mrf.mxu0
  %1974 = vmatprep.mubr.f32.mxu0 0.0
  %1975 = vmatmul.mubr.f32.gmra.mxu0 %v1466
  %v1976 = vpop.f32.mrf.mxu0
  %v1977 = vadd.f32 %v1358, %v1976
  %v1978 = vpop.f32.mrf.mxu0
  %1979 = vmatprep.mubr.f32.mxu0 0.0
  %1980 = vmatmul.mubr.f32.gmra.mxu0 %v1469
  %v1981 = vpop.f32.mrf.mxu0
  %v1982 = vadd.f32 %v1358, %v1981
  %v1983 = vpop.f32.mrf.mxu0
  %1984 = vmatprep.mubr.f32.mxu0 0.0
  %1985 = vmatmul.mubr.f32.gmra.mxu0 %v1472
  %v1986 = vpop.f32.mrf.mxu0
  %v1987 = vadd.f32 %v1358, %v1986
  %v1988 = vpop.f32.mrf.mxu0
  %1989 = vmatprep.mubr.f32.mxu0 0.0
  %1990 = vmatmul.mubr.f32.gmra.mxu0 %v1475
  %v1991 = vpop.f32.mrf.mxu0
  %v1992 = vadd.f32 %v1358, %v1991
  %v1993 = vpop.f32.mrf.mxu0
  %1994 = vmatprep.mubr.f32.mxu0 0.0
  %1995 = vmatmul.mubr.f32.gmra.mxu0 %v1478
  %v1996 = vpop.f32.mrf.mxu0
  %v1997 = vadd.f32 %v1358, %v1996
  %v1998 = vpop.f32.mrf.mxu0
  %1999 = vmatprep.mubr.f32.mxu0 0.0
  %2000 = vmatmul.mubr.f32.gmra.mxu0 %v1481
  %v2001 = vpop.f32.mrf.mxu0
  %v2002 = vadd.f32 %v1358, %v2001
  %v2003 = vpop.f32.mrf.mxu0
  %2004 = vmatprep.mubr.f32.mxu0 0.0
  %2005 = vmatmul.mubr.f32.gmra.mxu0 %v1484
  %v2006 = vpop.f32.mrf.mxu0
  %v2007 = vadd.f32 %v1358, %v2006
  %v2008 = vpop.f32.mrf.mxu0
  %2009 = vmatprep.mubr.f32.mxu0 0.0
  %2010 = vmatmul.mubr.f32.gmra.mxu0 %v1487
  %v2011 = vpop.f32.mrf.mxu0
  %v2012 = vadd.f32 %v1358, %v2011
  %v2013 = vpop.f32.mrf.mxu0
  %2014 = vmatprep.mubr.f32.mxu0 0.0
  %2015 = vmatmul.mubr.f32.gmra.mxu0 %v1490
  %v2016 = vpop.f32.mrf.mxu0
  %v2017 = vadd.f32 %v1358, %v2016
  %v2018 = vpop.f32.mrf.mxu0
  %2019 = vmatprep.mubr.f32.mxu0 0.0
  %2020 = vmatmul.mubr.f32.gmra.mxu0 %v1493
  %v2021 = vpop.f32.mrf.mxu0
  %v2022 = vadd.f32 %v1358, %v2021
  %v2023 = vpop.f32.mrf.mxu0
  %2024 = vmatprep.mubr.f32.mxu0 0.0
  %2025 = vmatmul.mubr.f32.gmra.mxu0 %v1496
  %v2026 = vpop.f32.mrf.mxu0
  %v2027 = vadd.f32 %v1358, %v2026
  %v2028 = vpop.f32.mrf.mxu0
  %2029 = vmatprep.mubr.f32.mxu0 0.0
  %2030 = vmatmul.mubr.f32.gmra.mxu0 %v1499
  %v2031 = vpop.f32.mrf.mxu0
  %v2032 = vadd.f32 %v1358, %v2031
  %v2033 = vpop.f32.mrf.mxu0
  %2034 = vmatprep.mubr.f32.mxu0 0.0
  %2035 = vmatmul.mubr.f32.gmra.mxu0 %v1502
  %v2036 = vpop.f32.mrf.mxu0
  %v2037 = vadd.f32 %v1358, %v2036
  %v2038 = vpop.f32.mrf.mxu0
  %2039 = vmatprep.mubr.f32.mxu0 0.0
  %2040 = vmatmul.mubr.f32.gmra.mxu0 %v1505
  %v2041 = vpop.f32.mrf.mxu0
  %v2042 = vadd.f32 %v1358, %v2041
  %v2043 = vpop.f32.mrf.mxu0
  %2044 = vmatprep.mubr.f32.mxu0 0.0
  %2045 = vmatmul.mubr.f32.gmra.mxu0 %v1508
  %v2046 = vpop.f32.mrf.mxu0
  %v2047 = vadd.f32 %v1358, %v2046
  %v2048 = vpop.f32.mrf.mxu0
  %2049 = vmatprep.mubr.f32.mxu0 0.0
  %2050 = vmatmul.mubr.f32.gmra.mxu0 %v1511
  %v2051 = vpop.f32.mrf.mxu0
  %v2052 = vadd.f32 %v1358, %v2051
  %v2053 = vpop.f32.mrf.mxu0
  %2054 = vmatprep.mubr.f32.mxu0 0.0
  %2055 = vmatmul.mubr.f32.gmra.mxu0 %v1514
  %v2056 = vpop.f32.mrf.mxu0
  %v2057 = vadd.f32 %v1358, %v2056
  %v2058 = vpop.f32.mrf.mxu0
  %2059 = vmatprep.mubr.f32.mxu0 0.0
  %2060 = vmatmul.mubr.f32.gmra.mxu0 %v1517
  %v2061 = vpop.f32.mrf.mxu0
  %v2062 = vadd.f32 %v1358, %v2061
  %v2063 = vpop.f32.mrf.mxu0
  %2064 = vmatprep.mubr.f32.mxu0 0.0
  %2065 = vmatmul.mubr.f32.gmra.mxu0 %v1520
  %v2066 = vpop.f32.mrf.mxu0
  %v2067 = vadd.f32 %v1358, %v2066
  %v2068 = vpop.f32.mrf.mxu0
  %2069 = vmatprep.mubr.f32.mxu0 0.0
  %2070 = vmatmul.mubr.f32.gmra.mxu0 %v1523
  %v2071 = vpop.f32.mrf.mxu0
  %v2072 = vadd.f32 %v1358, %v2071
  %v2073 = vpop.f32.mrf.mxu0
  %2074 = vmatprep.mubr.f32.mxu0 0.0
  %2075 = vmatmul.mubr.f32.gmra.mxu0 %v1526
  %v2076 = vpop.f32.mrf.mxu0
  %v2077 = vadd.f32 %v1358, %v2076
  %v2078 = vpop.f32.mrf.mxu0
  %2079 = vmatprep.mubr.f32.mxu0 0.0
  %2080 = vmatmul.mubr.f32.gmra.mxu0 %v1529
  %v2081 = vpop.f32.mrf.mxu0
  %v2082 = vadd.f32 %v1358, %v2081
  %v2083 = vpop.f32.mrf.mxu0
  %2084 = vmatprep.mubr.f32.mxu0 0.0
  %2085 = vmatmul.mubr.f32.gmra.mxu0 %v1532
  %v2086 = vpop.f32.mrf.mxu0
  %v2087 = vadd.f32 %v1358, %v2086
  %v2088 = vpop.f32.mrf.mxu0
  %2089 = vmatprep.mubr.f32.mxu0 0.0
  %2090 = vmatmul.mubr.f32.gmra.mxu0 %v1535
  %v2091 = vpop.f32.mrf.mxu0
  %v2092 = vadd.f32 %v1358, %v2091
  %v2093 = vpop.f32.mrf.mxu0
  %2094 = vmatprep.mubr.f32.mxu0 0.0
  %2095 = vmatmul.mubr.f32.gmra.mxu0 %v1538
  %v2096 = vpop.f32.mrf.mxu0
  %v2097 = vadd.f32 %v1358, %v2096
  %v2098 = vpop.f32.mrf.mxu0
  %2099 = vmatprep.mubr.f32.mxu0 0.0
  %2100 = vmatmul.mubr.f32.gmra.mxu0 %v1541
  %v2101 = vpop.f32.mrf.mxu0
  %v2102 = vadd.f32 %v1358, %v2101
  %v2103 = vpop.f32.mrf.mxu0
  %2104 = vmatprep.mubr.f32.mxu0 0.0
  %2105 = vmatmul.mubr.f32.gmra.mxu0 %v1544
  %v2106 = vpop.f32.mrf.mxu0
  %v2107 = vadd.f32 %v1358, %v2106
  %v2108 = vpop.f32.mrf.mxu0
  %2109 = vmatprep.mubr.f32.mxu0 0.0
  %2110 = vmatmul.mubr.f32.gmra.mxu0 %v1547
  %v2111 = vpop.f32.mrf.mxu0
  %v2112 = vadd.f32 %v1358, %v2111
  %v2113 = vpop.f32.mrf.mxu0
  %2114 = vmatprep.mubr.f32.mxu0 0.0
  %2115 = vmatmul.mubr.f32.gmra.mxu0 %v1550
  %v2116 = vpop.f32.mrf.mxu0
  %v2117 = vadd.f32 %v1358, %v2116
  %v2118 = vpop.f32.mrf.mxu0
  %2119 = vmatprep.mubr.f32.mxu0 0.0
  %2120 = vmatmul.mubr.f32.gmra.mxu0 %v1553
  %v2121 = vpop.f32.mrf.mxu0
  %v2122 = vadd.f32 %v1358, %v2121
  %v2123 = vpop.f32.mrf.mxu0
  %2124 = vmatprep.mubr.f32.mxu0 0.0
  %2125 = vmatmul.mubr.f32.gmra.mxu0 %v1556
  %v2126 = vpop.f32.mrf.mxu0
  %v2127 = vadd.f32 %v1358, %v2126
  %v2128 = vpop.f32.mrf.mxu0
  %2129 = vmatprep.mubr.f32.mxu0 0.0
  %2130 = vmatmul.mubr.f32.gmra.mxu0 %v1559
  %v2131 = vpop.f32.mrf.mxu0
  %v2132 = vadd.f32 %v1358, %v2131
  %v2133 = vpop.f32.mrf.mxu0
  %2134 = vmatprep.mubr.f32.mxu0 0.0
  %2135 = vmatmul.mubr.f32.gmra.mxu0 %v1562
  %v2136 = vpop.f32.mrf.mxu0
  %v2137 = vadd.f32 %v1358, %v2136
  %v2138 = vpop.f32.mrf.mxu0
  %2139 = vmatprep.mubr.f32.mxu0 0.0
  %2140 = vmatmul.mubr.f32.gmra.mxu0 %v1565
  %v2141 = vpop.f32.mrf.mxu0
  %v2142 = vadd.f32 %v1358, %v2141
  %v2143 = vpop.f32.mrf.mxu0
  %2144 = vmatprep.mubr.f32.mxu0 0.0
  %2145 = vmatmul.mubr.f32.gmra.mxu0 %v1568
  %v2146 = vpop.f32.mrf.mxu0
  %v2147 = vadd.f32 %v1358, %v2146
  %v2148 = vpop.f32.mrf.mxu0
  %2149 = vmatprep.mubr.f32.mxu0 0.0
  %2150 = vmatmul.mubr.f32.gmra.mxu0 %v1571
  %v2151 = vpop.f32.mrf.mxu0
  %v2152 = vadd.f32 %v1358, %v2151
  %v2153 = vpop.f32.mrf.mxu0
  %2154 = vmatprep.mubr.f32.mxu0 0.0
  %2155 = vmatmul.mubr.f32.gmra.mxu0 %v1574
  %v2156 = vpop.f32.mrf.mxu0
  %v2157 = vadd.f32 %v1358, %v2156
  %v2158 = vpop.f32.mrf.mxu0
  %2159 = vmatprep.mubr.f32.mxu0 0.0
  %2160 = vmatmul.mubr.f32.gmra.mxu0 %v1577
  %v2161 = vpop.f32.mrf.mxu0
  %v2162 = vadd.f32 %v1358, %v2161
  %v2163 = vpop.f32.mrf.mxu0
  %2164 = vmatprep.mubr.f32.mxu0 0.0
  %2165 = vmatmul.mubr.f32.gmra.mxu0 %v1580
  %v2166 = vpop.f32.mrf.mxu0
  %v2167 = vadd.f32 %v1358, %v2166
  %v2168 = vpop.f32.mrf.mxu0
  %2169 = vmatprep.mubr.f32.mxu0 0.0
  %2170 = vmatmul.mubr.f32.gmra.mxu0 %v1583
  %v2171 = vpop.f32.mrf.mxu0
  %v2172 = vadd.f32 %v1358, %v2171
  %v2173 = vpop.f32.mrf.mxu0
  %2174 = vmatprep.mubr.f32.mxu0 0.0
  %2175 = vmatmul.mubr.f32.gmra.mxu0 %v1586
  %v2176 = vpop.f32.mrf.mxu0
  %v2177 = vadd.f32 %v1358, %v2176
  %v2178 = vpop.f32.mrf.mxu0
  %2179 = vmatprep.mubr.f32.mxu0 0.0
  %2180 = vmatmul.mubr.f32.gmra.mxu0 %v1589
  %v2181 = vpop.f32.mrf.mxu0
  %v2182 = vadd.f32 %v1358, %v2181
  %v2183 = vpop.f32.mrf.mxu0
  %2184 = vmatprep.mubr.f32.mxu0 0.0
  %2185 = vmatmul.mubr.f32.gmra.mxu0 %v1592
  %v2186 = vpop.f32.mrf.mxu0
  %v2187 = vadd.f32 %v1358, %v2186
  %v2188 = vpop.f32.mrf.mxu0
  %2189 = vmatprep.mubr.f32.mxu0 0.0
  %2190 = vmatmul.mubr.f32.gmra.mxu0 %v1595
  %v2191 = vpop.f32.mrf.mxu0
  %v2192 = vadd.f32 %v1358, %v2191
  %v2193 = vpop.f32.mrf.mxu0
  %2194 = vmatprep.mubr.f32.mxu0 0.0
  %2195 = vmatmul.mubr.f32.gmra.mxu0 %v1598
  %v2196 = vpop.f32.mrf.mxu0
  %v2197 = vadd.f32 %v1358, %v2196
  %v2198 = vpop.f32.mrf.mxu0
  %2199 = vmatprep.mubr.f32.mxu0 0.0
  %2200 = vmatmul.mubr.f32.gmra.mxu0 %v1601
  %v2201 = vpop.f32.mrf.mxu0
  %v2202 = vadd.f32 %v1358, %v2201
  %v2203 = vpop.f32.mrf.mxu0
  %2204 = vmatprep.mubr.f32.mxu0 0.0
  %2205 = vmatmul.mubr.f32.gmra.mxu0 %v1604
  %v2206 = vpop.f32.mrf.mxu0
  %v2207 = vadd.f32 %v1358, %v2206
  %v2208 = vpop.f32.mrf.mxu0
  %2209 = vmatprep.mubr.f32.mxu0 0.0
  %2210 = vmatmul.mubr.f32.gmra.mxu0 %v1607
  %v2211 = vpop.f32.mrf.mxu0
  %v2212 = vadd.f32 %v1358, %v2211
  %v2213 = vpop.f32.mrf.mxu0
  %2214 = vmatprep.mubr.f32.mxu0 0.0
  %2215 = vmatmul.mubr.f32.gmra.mxu0 %v1610
  %v2216 = vpop.f32.mrf.mxu0
  %v2217 = vadd.f32 %v1358, %v2216
  %v2218 = vpop.f32.mrf.mxu0
  %2219 = vmatprep.mubr.f32.mxu0 0.0
  %2220 = vmatmul.mubr.f32.gmra.mxu0 %v1613
  %v2221 = vpop.f32.mrf.mxu0
  %v2222 = vadd.f32 %v1358, %v2221
  %v2223 = vpop.f32.mrf.mxu0
  %2224 = vmatprep.mubr.f32.mxu0 0.0
  %2225 = vmatmul.mubr.f32.gmra.mxu0 %v1616
  %v2226 = vpop.f32.mrf.mxu0
  %v2227 = vadd.f32 %v1358, %v2226
  %v2228 = vpop.f32.mrf.mxu0
  %2229 = vmatprep.mubr.f32.mxu0 0.0
  %2230 = vmatmul.mubr.f32.gmra.mxu0 %v1619
  %v2231 = vpop.f32.mrf.mxu0
  %v2232 = vadd.f32 %v1358, %v2231
  %v2233 = vpop.f32.mrf.mxu0
  %2234 = vmatprep.mubr.f32.mxu0 0.0
  %2235 = vmatmul.mubr.f32.gmra.mxu0 %v1622
  %v2236 = vpop.f32.mrf.mxu0
  %v2237 = vadd.f32 %v1358, %v2236
  %v2238 = vpop.f32.mrf.mxu0
  %2239 = vmatprep.mubr.f32.mxu0 0.0
  %2240 = vmatmul.mubr.f32.gmra.mxu0 %v1625
  %v2241 = vpop.f32.mrf.mxu0
  %v2242 = vadd.f32 %v1358, %v2241
  %v2243 = vpop.f32.mrf.mxu0
  %2244 = vmatprep.mubr.f32.mxu0 0.0
  %2245 = vmatmul.mubr.f32.gmra.mxu0 %v1628
  %v2246 = vpop.f32.mrf.mxu0
  %v2247 = vadd.f32 %v1358, %v2246
  %v2248 = vpop.f32.mrf.mxu0
  %2249 = vmatprep.mubr.f32.mxu0 0.0
  %2250 = vmatmul.mubr.f32.gmra.mxu0 %v1631
  %v2251 = vpop.f32.mrf.mxu0
  %v2252 = vadd.f32 %v1358, %v2251
  %v2253 = vpop.f32.mrf.mxu0
  %2254 = vmatprep.mubr.f32.mxu0 0.0
  %2255 = vmatmul.mubr.f32.gmra.mxu0 %v1634
  %v2256 = vpop.f32.mrf.mxu0
  %v2257 = vadd.f32 %v1358, %v2256
  %v2258 = vpop.f32.mrf.mxu0
  %2259 = vmatprep.mubr.f32.mxu0 0.0
  %2260 = vmatmul.mubr.f32.gmra.mxu0 %v1637
  %v2261 = vpop.f32.mrf.mxu0
  %v2262 = vadd.f32 %v1358, %v2261
  %v2263 = vpop.f32.mrf.mxu0
  %2264 = vmatprep.mubr.f32.mxu0 0.0
  %2265 = vmatmul.mubr.f32.gmra.mxu0 %v1640
  %v2266 = vpop.f32.mrf.mxu0
  %v2267 = vadd.f32 %v1358, %v2266
  %v2268 = vpop.f32.mrf.mxu0
  %2269 = vmatprep.mubr.f32.mxu0 0.0
  %2270 = vmatmul.mubr.f32.gmra.mxu0 %v1643
  %v2271 = vpop.f32.mrf.mxu0
  %v2272 = vadd.f32 %v1358, %v2271
  %v2273 = vpop.f32.mrf.mxu0
  %2274 = vmatprep.mubr.f32.mxu0 0.0
  %2275 = vmatmul.mubr.f32.gmra.mxu0 %v1646
  %v2276 = vpop.f32.mrf.mxu0
  %v2277 = vadd.f32 %v1358, %v2276
  %v2278 = vpop.f32.mrf.mxu0
  %2279 = vmatprep.mubr.f32.mxu0 0.0
  %2280 = vmatmul.mubr.f32.gmra.mxu0 %v1649
  %v2281 = vpop.f32.mrf.mxu0
  %v2282 = vadd.f32 %v1358, %v2281
  %v2283 = vpop.f32.mrf.mxu0
  %2284 = vmatprep.mubr.f32.mxu0 0.0
  %2285 = vmatmul.mubr.f32.gmra.mxu0 %v1652
  %v2286 = vpop.f32.mrf.mxu0
  %v2287 = vadd.f32 %v1358, %v2286
  %v2288 = vpop.f32.mrf.mxu0
  %2289 = vmatprep.mubr.f32.mxu0 0.0
  %2290 = vmatmul.mubr.f32.gmra.mxu0 %v1655
  %v2291 = vpop.f32.mrf.mxu0
  %v2292 = vadd.f32 %v1358, %v2291
  %v2293 = vpop.f32.mrf.mxu0
  %2294 = vmatprep.mubr.f32.mxu0 0.0
  %2295 = vmatmul.mubr.f32.gmra.mxu0 %v1658
  %v2296 = vpop.f32.mrf.mxu0
  %v2297 = vadd.f32 %v1358, %v2296
  %v2298 = vpop.f32.mrf.mxu0
  %2299 = vmatprep.mubr.f32.mxu0 0.0
  %2300 = vmatmul.mubr.f32.gmra.mxu0 %v1661
  %v2301 = vpop.f32.mrf.mxu0
  %v2302 = vadd.f32 %v1358, %v2301
  %v2303 = vpop.f32.mrf.mxu0
  %2304 = vmatprep.mubr.f32.mxu0 0.0
  %2305 = vmatmul.mubr.f32.gmra.mxu0 %v1664
  %v2306 = vpop.f32.mrf.mxu0
  %v2307 = vadd.f32 %v1358, %v2306
  %v2308 = vpop.f32.mrf.mxu0
  %2309 = vmatprep.mubr.f32.mxu0 0.0
  %2310 = vmatmul.mubr.f32.gmra.mxu0 %v1667
  %v2311 = vpop.f32.mrf.mxu0
  %v2312 = vadd.f32 %v1358, %v2311
  %v2313 = vpop.f32.mrf.mxu0
  %2314 = vmatprep.mubr.f32.mxu0 0.0
  %2315 = vmatmul.mubr.f32.gmra.mxu0 %v1670
  %v2316 = vpop.f32.mrf.mxu0
  %v2317 = vadd.f32 %v1358, %v2316
  %v2318 = vpop.f32.mrf.mxu0
  %2319 = vmatprep.mubr.f32.mxu0 0.0
  %2320 = vmatmul.mubr.f32.gmra.mxu0 %v1673
  %v2321 = vpop.f32.mrf.mxu0
  %v2322 = vadd.f32 %v1358, %v2321
  %v2323 = vpop.f32.mrf.mxu0
  %2324 = vmatprep.mubr.f32.mxu0 0.0
  %2325 = vmatmul.mubr.f32.gmra.mxu0 %v1676
  %v2326 = vpop.f32.mrf.mxu0
  %v2327 = vadd.f32 %v1358, %v2326
  %v2328 = vpop.f32.mrf.mxu0
  %2329 = vmatprep.mubr.f32.mxu0 0.0
  %2330 = vmatmul.mubr.f32.gmra.mxu0 %v1679
  %v2331 = vpop.f32.mrf.mxu0
  %v2332 = vadd.f32 %v1358, %v2331
  %v2333 = vpop.f32.mrf.mxu0
  %2334 = vmatprep.mubr.f32.mxu0 0.0
  %2335 = vmatmul.mubr.f32.gmra.mxu0 %v1682
  %v2336 = vpop.f32.mrf.mxu0
  %v2337 = vadd.f32 %v1358, %v2336
  %v2338 = vpop.f32.mrf.mxu0
  %2339 = vmatprep.mubr.f32.mxu0 0.0
  %2340 = vmatmul.mubr.f32.gmra.mxu0 %v1685
  %v2341 = vpop.f32.mrf.mxu0
  %v2342 = vadd.f32 %v1358, %v2341
  %v2343 = vpop.f32.mrf.mxu0
  %2344 = vmatprep.mubr.f32.mxu0 0.0
  %2345 = vmatmul.mubr.f32.gmra.mxu0 %v1688
  %v2346 = vpop.f32.mrf.mxu0
  %v2347 = vadd.f32 %v1358, %v2346
  %v2348 = vpop.f32.mrf.mxu0
  %2349 = vmatprep.mubr.f32.mxu0 0.0
  %2350 = vmatmul.mubr.f32.gmra.mxu0 %v1691
  %v2351 = vpop.f32.mrf.mxu0
  %v2352 = vadd.f32 %v1358, %v2351
  %v2353 = vpop.f32.mrf.mxu0
  %2354 = vmatprep.mubr.f32.mxu0 0.0
  %2355 = vmatmul.mubr.f32.gmra.mxu0 %v1694
  %v2356 = vpop.f32.mrf.mxu0
  %v2357 = vadd.f32 %v1358, %v2356
  %v2358 = vpop.f32.mrf.mxu0
  %2359 = vmatprep.mubr.f32.mxu0 0.0
  %2360 = vmatmul.mubr.f32.gmra.mxu0 %v1697
  %v2361 = vpop.f32.mrf.mxu0
  %v2362 = vadd.f32 %v1358, %v2361
  %v2363 = vpop.f32.mrf.mxu0
  %2364 = vmatprep.mubr.f32.mxu0 0.0
  %2365 = vmatmul.mubr.f32.gmra.mxu0 %v1700
  %v2366 = vpop.f32.mrf.mxu0
  %v2367 = vadd.f32 %v1358, %v2366
  %v2368 = vpop.f32.mrf.mxu0
  %2369 = vmatprep.mubr.f32.mxu0 0.0
  %2370 = vmatmul.mubr.f32.gmra.mxu0 %v1703
  %v2371 = vpop.f32.mrf.mxu0
  %v2372 = vadd.f32 %v1358, %v2371
  %v2373 = vpop.f32.mrf.mxu0
  %2374 = vmatprep.mubr.f32.mxu0 0.0
  %2375 = vmatmul.mubr.f32.gmra.mxu0 %v1706
  %v2376 = vpop.f32.mrf.mxu0
  %v2377 = vadd.f32 %v1358, %v2376
  %v2378 = vpop.f32.mrf.mxu0
  %2379 = vmatprep.mubr.f32.mxu0 0.0
  %2380 = vmatmul.mubr.f32.gmra.mxu0 %v1709
  %v2381 = vpop.f32.mrf.mxu0
  %v2382 = vadd.f32 %v1358, %v2381
  %v2383 = vpop.f32.mrf.mxu0
  %2384 = vmatprep.mubr.f32.mxu0 0.0
  %2385 = vmatmul.mubr.f32.gmra.mxu0 %v1712
  %v2386 = vpop.f32.mrf.mxu0
  %v2387 = vadd.f32 %v1358, %v2386
  %v2388 = vpop.f32.mrf.mxu0
  %2389 = vmatprep.mubr.f32.mxu0 0.0
  %2390 = vmatmul.mubr.f32.gmra.mxu0 %v1715
  %v2391 = vpop.f32.mrf.mxu0
  %v2392 = vadd.f32 %v1358, %v2391
  %v2393 = vpop.f32.mrf.mxu0
  %2394 = vmatprep.mubr.f32.mxu0 0.0
  %2395 = vmatmul.mubr.f32.gmra.mxu0 %v1718
  %v2396 = vpop.f32.mrf.mxu0
  %v2397 = vadd.f32 %v1358, %v2396
  %v2398 = vpop.f32.mrf.mxu0
  %2399 = vmatprep.mubr.f32.mxu0 0.0
  %2400 = vmatmul.mubr.f32.gmra.mxu0 %v1721
  %v2401 = vpop.f32.mrf.mxu0
  %v2402 = vadd.f32 %v1358, %v2401
  %v2403 = vpop.f32.mrf.mxu0
  %2404 = vmatprep.mubr.f32.mxu0 0.0
  %2405 = vmatmul.mubr.f32.gmra.mxu0 %v1724
  %v2406 = vpop.f32.mrf.mxu0
  %v2407 = vadd.f32 %v1358, %v2406
  %v2408 = vpop.f32.mrf.mxu0
  %2409 = vmatprep.mubr.f32.mxu0 0.0
  %2410 = vmatmul.mubr.f32.gmra.mxu0 %v1727
  %v2411 = vpop.f32.mrf.mxu0
  %v2412 = vadd.f32 %v1358, %v2411
  %v2413 = vpop.f32.mrf.mxu0
  %2414 = vmatprep.mubr.f32.mxu0 0.0
  %2415 = vmatmul.mubr.f32.gmra.mxu0 %v1730
  %v2416 = vpop.f32.mrf.mxu0
  %v2417 = vadd.f32 %v1358, %v2416
  %v2418 = vpop.f32.mrf.mxu0
  %2419 = vmatprep.mubr.f32.mxu0 0.0
  %2420 = vmatmul.mubr.f32.gmra.mxu0 %v1733
  %v2421 = vpop.f32.mrf.mxu0
  %v2422 = vadd.f32 %v1358, %v2421
  %v2423 = vpop.f32.mrf.mxu0
  %2424 = vdwg.mxu0
  %v2425 = vtanh.pop %v1802
  %v2426 = vtanh.pop %v1807
  %v2427 = vtanh.pop %v1812
  %v2428 = vtanh.pop %v1817
  %v2429 = vtanh.pop %v1822
  %v2430 = vtanh.pop %v1827
  %v2431 = vtanh.pop %v1832
  %v2432 = vtanh.pop %v1837
  %v2433 = vtanh.pop %v1842
  %v2434 = vtanh.pop %v1847
  %v2435 = vtanh.pop %v1852
  %v2436 = vtanh.pop %v1857
  %v2437 = vtanh.pop %v1862
  %v2438 = vtanh.pop %v1867
  %v2439 = vtanh.pop %v1872
  %v2440 = vtanh.pop %v1877
  %v2441 = vtanh.pop %v1882
  %v2442 = vtanh.pop %v1887
  %v2443 = vtanh.pop %v1892
  %v2444 = vtanh.pop %v1897
  %v2445 = vtanh.pop %v1902
  %v2446 = vtanh.pop %v1907
  %v2447 = vtanh.pop %v1912
  %v2448 = vtanh.pop %v1917
  %v2449 = vtanh.pop %v1922
  %v2450 = vtanh.pop %v1927
  %v2451 = vtanh.pop %v1932
  %v2452 = vtanh.pop %v1937
  %v2453 = vtanh.pop %v1942
  %v2454 = vtanh.pop %v1947
  %v2455 = vtanh.pop %v1952
  %v2456 = vtanh.pop %v1957
  %v2457 = vtanh.pop %v1962
  %v2458 = vtanh.pop %v1967
  %v2459 = vtanh.pop %v1972
  %v2460 = vtanh.pop %v1977
  %v2461 = vtanh.pop %v1982
  %v2462 = vtanh.pop %v1987
  %v2463 = vtanh.pop %v1992
  %v2464 = vtanh.pop %v1997
  %v2465 = vtanh.pop %v2002
  %v2466 = vtanh.pop %v2007
  %v2467 = vtanh.pop %v2012
  %v2468 = vtanh.pop %v2017
  %v2469 = vtanh.pop %v2022
  %v2470 = vtanh.pop %v2027
  %v2471 = vtanh.pop %v2032
  %v2472 = vtanh.pop %v2037
  %v2473 = vtanh.pop %v2042
  %v2474 = vtanh.pop %v2047
  %v2475 = vtanh.pop %v2052
  %v2476 = vtanh.pop %v2057
  %v2477 = vtanh.pop %v2062
  %v2478 = vtanh.pop %v2067
  %v2479 = vtanh.pop %v2072
  %v2480 = vtanh.pop %v2077
  %v2481 = vtanh.pop %v2082
  %v2482 = vtanh.pop %v2087
  %v2483 = vtanh.pop %v2092
  %v2484 = vtanh.pop %v2097
  %v2485 = vtanh.pop %v2102
  %v2486 = vtanh.pop %v2107
  %v2487 = vtanh.pop %v2112
  %v2488 = vtanh.pop %v2117
  %v2489 = vtanh.pop %v2122
  %v2490 = vtanh.pop %v2127
  %v2491 = vtanh.pop %v2132
  %v2492 = vtanh.pop %v2137
  %v2493 = vtanh.pop %v2142
  %v2494 = vtanh.pop %v2147
  %v2495 = vtanh.pop %v2152
  %v2496 = vtanh.pop %v2157
  %v2497 = vtanh.pop %v2162
  %v2498 = vtanh.pop %v2167
  %v2499 = vtanh.pop %v2172
  %v2500 = vtanh.pop %v2177
  %v2501 = vtanh.pop %v2182
  %v2502 = vtanh.pop %v2187
  %v2503 = vtanh.pop %v2192
  %v2504 = vtanh.pop %v2197
  %v2505 = vtanh.pop %v2202
  %v2506 = vtanh.pop %v2207
  %v2507 = vtanh.pop %v2212
  %v2508 = vtanh.pop %v2217
  %v2509 = vtanh.pop %v2222
  %v2510 = vtanh.pop %v2227
  %v2511 = vtanh.pop %v2232
  %v2512 = vtanh.pop %v2237
  %v2513 = vtanh.pop %v2242
  %v2514 = vtanh.pop %v2247
  %v2515 = vtanh.pop %v2252
  %v2516 = vtanh.pop %v2257
  %v2517 = vtanh.pop %v2262
  %v2518 = vtanh.pop %v2267
  %v2519 = vtanh.pop %v2272
  %v2520 = vtanh.pop %v2277
  %v2521 = vtanh.pop %v2282
  %v2522 = vtanh.pop %v2287
  %v2523 = vtanh.pop %v2292
  %v2524 = vtanh.pop %v2297
  %v2525 = vtanh.pop %v2302
  %v2526 = vtanh.pop %v2307
  %v2527 = vtanh.pop %v2312
  %v2528 = vtanh.pop %v2317
  %v2529 = vtanh.pop %v2322
  %v2530 = vtanh.pop %v2327
  %v2531 = vtanh.pop %v2332
  %v2532 = vtanh.pop %v2337
  %v2533 = vtanh.pop %v2342
  %v2534 = vtanh.pop %v2347
  %v2535 = vtanh.pop %v2352
  %v2536 = vtanh.pop %v2357
  %v2537 = vtanh.pop %v2362
  %v2538 = vtanh.pop %v2367
  %v2539 = vtanh.pop %v2372
  %v2540 = vtanh.pop %v2377
  %v2541 = vtanh.pop %v2382
  %v2542 = vtanh.pop %v2387
  %v2543 = vtanh.pop %v2392
  %v2544 = vtanh.pop %v2397
  %v2545 = vtanh.pop %v2402
  %v2546 = vtanh.pop %v2407
  %v2547 = vtanh.pop %v2412
  %v2548 = vtanh.pop %v2417
  %v2549 = vtanh.pop %v2422
  %v2550 = vlaneseq
  %v2551 = vshrl.u32 %v2550, 7
  %v2552 = vsub.s32 0, %v2551
  %v2553 = vrot.slane %v144, %v2552
  %v2554 = vmul.f32 %v2425, %v2553
  %v2555 = vmul.f32 %v2426, %v2553
  %v2556 = vmul.f32 %v2427, %v2553
  %v2557 = vmul.f32 %v2428, %v2553
  %v2558 = vmul.f32 %v2429, %v2553
  %v2559 = vmul.f32 %v2430, %v2553
  %v2560 = vmul.f32 %v2431, %v2553
  %v2561 = vmul.f32 %v2432, %v2553
  %v2562 = vmul.f32 %v2433, %v2553
  %v2563 = vmul.f32 %v2434, %v2553
  %v2564 = vmul.f32 %v2435, %v2553
  %v2565 = vmul.f32 %v2436, %v2553
  %v2566 = vmul.f32 %v2437, %v2553
  %v2567 = vmul.f32 %v2438, %v2553
  %v2568 = vmul.f32 %v2439, %v2553
  %v2569 = vmul.f32 %v2440, %v2553
  %v2570 = vmul.f32 %v2441, %v2553
  %v2571 = vmul.f32 %v2442, %v2553
  %v2572 = vmul.f32 %v2443, %v2553
  %v2573 = vmul.f32 %v2444, %v2553
  %v2574 = vmul.f32 %v2445, %v2553
  %v2575 = vmul.f32 %v2446, %v2553
  %v2576 = vmul.f32 %v2447, %v2553
  %v2577 = vmul.f32 %v2448, %v2553
  %v2578 = vmul.f32 %v2449, %v2553
  %v2579 = vmul.f32 %v2450, %v2553
  %v2580 = vmul.f32 %v2451, %v2553
  %v2581 = vmul.f32 %v2452, %v2553
  %v2582 = vmul.f32 %v2453, %v2553
  %v2583 = vmul.f32 %v2454, %v2553
  %v2584 = vmul.f32 %v2455, %v2553
  %v2585 = vmul.f32 %v2456, %v2553
  %v2586 = vmul.f32 %v2457, %v2553
  %v2587 = vmul.f32 %v2458, %v2553
  %v2588 = vmul.f32 %v2459, %v2553
  %v2589 = vmul.f32 %v2460, %v2553
  %v2590 = vmul.f32 %v2461, %v2553
  %v2591 = vmul.f32 %v2462, %v2553
  %v2592 = vmul.f32 %v2463, %v2553
  %v2593 = vmul.f32 %v2464, %v2553
  %v2594 = vmul.f32 %v2465, %v2553
  %v2595 = vmul.f32 %v2466, %v2553
  %v2596 = vmul.f32 %v2467, %v2553
  %v2597 = vmul.f32 %v2468, %v2553
  %v2598 = vmul.f32 %v2469, %v2553
  %v2599 = vmul.f32 %v2470, %v2553
  %v2600 = vmul.f32 %v2471, %v2553
  %v2601 = vmul.f32 %v2472, %v2553
  %v2602 = vmul.f32 %v2473, %v2553
  %v2603 = vmul.f32 %v2474, %v2553
  %v2604 = vmul.f32 %v2475, %v2553
  %v2605 = vmul.f32 %v2476, %v2553
  %v2606 = vmul.f32 %v2477, %v2553
  %v2607 = vmul.f32 %v2478, %v2553
  %v2608 = vmul.f32 %v2479, %v2553
  %v2609 = vmul.f32 %v2480, %v2553
  %v2610 = vmul.f32 %v2481, %v2553
  %v2611 = vmul.f32 %v2482, %v2553
  %v2612 = vmul.f32 %v2483, %v2553
  %v2613 = vmul.f32 %v2484, %v2553
  %v2614 = vmul.f32 %v2485, %v2553
  %v2615 = vmul.f32 %v2486, %v2553
  %v2616 = vmul.f32 %v2487, %v2553
  %v2617 = vmul.f32 %v2488, %v2553
  %v2618 = vmul.f32 %v2489, %v2553
  %v2619 = vmul.f32 %v2490, %v2553
  %v2620 = vmul.f32 %v2491, %v2553
  %v2621 = vmul.f32 %v2492, %v2553
  %v2622 = vmul.f32 %v2493, %v2553
  %v2623 = vmul.f32 %v2494, %v2553
  %v2624 = vmul.f32 %v2495, %v2553
  %v2625 = vmul.f32 %v2496, %v2553
  %v2626 = vmul.f32 %v2497, %v2553
  %v2627 = vmul.f32 %v2498, %v2553
  %v2628 = vmul.f32 %v2499, %v2553
  %v2629 = vmul.f32 %v2500, %v2553
  %v2630 = vmul.f32 %v2501, %v2553
  %v2631 = vmul.f32 %v2502, %v2553
  %v2632 = vmul.f32 %v2503, %v2553
  %v2633 = vmul.f32 %v2504, %v2553
  %v2634 = vmul.f32 %v2505, %v2553
  %v2635 = vmul.f32 %v2506, %v2553
  %v2636 = vmul.f32 %v2507, %v2553
  %v2637 = vmul.f32 %v2508, %v2553
  %v2638 = vmul.f32 %v2509, %v2553
  %v2639 = vmul.f32 %v2510, %v2553
  %v2640 = vmul.f32 %v2511, %v2553
  %v2641 = vmul.f32 %v2512, %v2553
  %v2642 = vmul.f32 %v2513, %v2553
  %v2643 = vmul.f32 %v2514, %v2553
  %v2644 = vmul.f32 %v2515, %v2553
  %v2645 = vmul.f32 %v2516, %v2553
  %v2646 = vmul.f32 %v2517, %v2553
  %v2647 = vmul.f32 %v2518, %v2553
  %v2648 = vmul.f32 %v2519, %v2553
  %v2649 = vmul.f32 %v2520, %v2553
  %v2650 = vmul.f32 %v2521, %v2553
  %v2651 = vmul.f32 %v2522, %v2553
  %v2652 = vmul.f32 %v2523, %v2553
  %v2653 = vmul.f32 %v2524, %v2553
  %v2654 = vmul.f32 %v2525, %v2553
  %v2655 = vmul.f32 %v2526, %v2553
  %v2656 = vmul.f32 %v2527, %v2553
  %v2657 = vmul.f32 %v2528, %v2553
  %v2658 = vmul.f32 %v2529, %v2553
  %v2659 = vmul.f32 %v2530, %v2553
  %v2660 = vmul.f32 %v2531, %v2553
  %v2661 = vmul.f32 %v2532, %v2553
  %v2662 = vmul.f32 %v2533, %v2553
  %v2663 = vmul.f32 %v2534, %v2553
  %v2664 = vmul.f32 %v2535, %v2553
  %v2665 = vmul.f32 %v2536, %v2553
  %v2666 = vmul.f32 %v2537, %v2553
  %v2667 = vmul.f32 %v2538, %v2553
  %v2668 = vmul.f32 %v2539, %v2553
  %v2669 = vmul.f32 %v2540, %v2553
  %v2670 = vmul.f32 %v2541, %v2553
  %v2671 = vmul.f32 %v2542, %v2553
  %v2672 = vmul.f32 %v2543, %v2553
  %v2673 = vmul.f32 %v2544, %v2553
  %v2674 = vmul.f32 %v2545, %v2553
  %v2675 = vmul.f32 %v2546, %v2553
  %v2676 = vmul.f32 %v2547, %v2553
  %v2677 = vmul.f32 %v2548, %v2553
  %v2678 = vmul.f32 %v2549, %v2553
  %v2679 = vsel %vm1359, %v2554, 0.0
  %2680 = vadd.xlane.f32.xlu0 %v2679
  %v2681 = vpop.xlane.xlu0 %2680
  %v2682 = vsel %vm1359, %v2555, 0.0
  %2683 = vadd.xlane.f32.xlu0 %v2682
  %v2684 = vpop.xlane.xlu0 %2683
  %v2685 = vsel %vm1359, %v2556, 0.0
  %2686 = vadd.xlane.f32.xlu0 %v2685
  %v2687 = vpop.xlane.xlu0 %2686
  %v2688 = vsel %vm1359, %v2557, 0.0
  %2689 = vadd.xlane.f32.xlu0 %v2688
  %v2690 = vpop.xlane.xlu0 %2689
  %v2691 = vsel %vm1359, %v2558, 0.0
  %2692 = vadd.xlane.f32.xlu0 %v2691
  %v2693 = vpop.xlane.xlu0 %2692
  %v2694 = vsel %vm1359, %v2559, 0.0
  %2695 = vadd.xlane.f32.xlu0 %v2694
  %v2696 = vpop.xlane.xlu0 %2695
  %v2697 = vsel %vm1359, %v2560, 0.0
  %2698 = vadd.xlane.f32.xlu0 %v2697
  %v2699 = vpop.xlane.xlu0 %2698
  %v2700 = vsel %vm1359, %v2561, 0.0
  %2701 = vadd.xlane.f32.xlu0 %v2700
  %v2702 = vpop.xlane.xlu0 %2701
  %v2703 = vsel %vm1359, %v2562, 0.0
  %2704 = vadd.xlane.f32.xlu0 %v2703
  %v2705 = vpop.xlane.xlu0 %2704
  %v2706 = vsel %vm1359, %v2563, 0.0
  %2707 = vadd.xlane.f32.xlu0 %v2706
  %v2708 = vpop.xlane.xlu0 %2707
  %v2709 = vsel %vm1359, %v2564, 0.0
  %2710 = vadd.xlane.f32.xlu0 %v2709
  %v2711 = vpop.xlane.xlu0 %2710
  %v2712 = vsel %vm1359, %v2565, 0.0
  %2713 = vadd.xlane.f32.xlu0 %v2712
  %v2714 = vpop.xlane.xlu0 %2713
  %v2715 = vsel %vm1359, %v2566, 0.0
  %2716 = vadd.xlane.f32.xlu0 %v2715
  %v2717 = vpop.xlane.xlu0 %2716
  %v2718 = vsel %vm1359, %v2567, 0.0
  %2719 = vadd.xlane.f32.xlu0 %v2718
  %v2720 = vpop.xlane.xlu0 %2719
  %v2721 = vsel %vm1359, %v2568, 0.0
  %2722 = vadd.xlane.f32.xlu0 %v2721
  %v2723 = vpop.xlane.xlu0 %2722
  %v2724 = vsel %vm1359, %v2569, 0.0
  %2725 = vadd.xlane.f32.xlu0 %v2724
  %v2726 = vpop.xlane.xlu0 %2725
  %v2727 = vsel %vm1359, %v2570, 0.0
  %2728 = vadd.xlane.f32.xlu0 %v2727
  %v2729 = vpop.xlane.xlu0 %2728
  %v2730 = vsel %vm1359, %v2571, 0.0
  %2731 = vadd.xlane.f32.xlu0 %v2730
  %v2732 = vpop.xlane.xlu0 %2731
  %v2733 = vsel %vm1359, %v2572, 0.0
  %2734 = vadd.xlane.f32.xlu0 %v2733
  %v2735 = vpop.xlane.xlu0 %2734
  %v2736 = vsel %vm1359, %v2573, 0.0
  %2737 = vadd.xlane.f32.xlu0 %v2736
  %v2738 = vpop.xlane.xlu0 %2737
  %v2739 = vsel %vm1359, %v2574, 0.0
  %2740 = vadd.xlane.f32.xlu0 %v2739
  %v2741 = vpop.xlane.xlu0 %2740
  %v2742 = vsel %vm1359, %v2575, 0.0
  %2743 = vadd.xlane.f32.xlu0 %v2742
  %v2744 = vpop.xlane.xlu0 %2743
  %v2745 = vsel %vm1359, %v2576, 0.0
  %2746 = vadd.xlane.f32.xlu0 %v2745
  %v2747 = vpop.xlane.xlu0 %2746
  %v2748 = vsel %vm1359, %v2577, 0.0
  %2749 = vadd.xlane.f32.xlu0 %v2748
  %v2750 = vpop.xlane.xlu0 %2749
  %v2751 = vsel %vm1359, %v2578, 0.0
  %2752 = vadd.xlane.f32.xlu0 %v2751
  %v2753 = vpop.xlane.xlu0 %2752
  %v2754 = vsel %vm1359, %v2579, 0.0
  %2755 = vadd.xlane.f32.xlu0 %v2754
  %v2756 = vpop.xlane.xlu0 %2755
  %v2757 = vsel %vm1359, %v2580, 0.0
  %2758 = vadd.xlane.f32.xlu0 %v2757
  %v2759 = vpop.xlane.xlu0 %2758
  %v2760 = vsel %vm1359, %v2581, 0.0
  %2761 = vadd.xlane.f32.xlu0 %v2760
  %v2762 = vpop.xlane.xlu0 %2761
  %v2763 = vsel %vm1359, %v2582, 0.0
  %2764 = vadd.xlane.f32.xlu0 %v2763
  %v2765 = vpop.xlane.xlu0 %2764
  %v2766 = vsel %vm1359, %v2583, 0.0
  %2767 = vadd.xlane.f32.xlu0 %v2766
  %v2768 = vpop.xlane.xlu0 %2767
  %v2769 = vsel %vm1359, %v2584, 0.0
  %2770 = vadd.xlane.f32.xlu0 %v2769
  %v2771 = vpop.xlane.xlu0 %2770
  %v2772 = vsel %vm1359, %v2585, 0.0
  %2773 = vadd.xlane.f32.xlu0 %v2772
  %v2774 = vpop.xlane.xlu0 %2773
  %v2775 = vsel %vm1359, %v2586, 0.0
  %2776 = vadd.xlane.f32.xlu0 %v2775
  %v2777 = vpop.xlane.xlu0 %2776
  %v2778 = vsel %vm1359, %v2587, 0.0
  %2779 = vadd.xlane.f32.xlu0 %v2778
  %v2780 = vpop.xlane.xlu0 %2779
  %v2781 = vsel %vm1359, %v2588, 0.0
  %2782 = vadd.xlane.f32.xlu0 %v2781
  %v2783 = vpop.xlane.xlu0 %2782
  %v2784 = vsel %vm1359, %v2589, 0.0
  %2785 = vadd.xlane.f32.xlu0 %v2784
  %v2786 = vpop.xlane.xlu0 %2785
  %v2787 = vsel %vm1359, %v2590, 0.0
  %2788 = vadd.xlane.f32.xlu0 %v2787
  %v2789 = vpop.xlane.xlu0 %2788
  %v2790 = vsel %vm1359, %v2591, 0.0
  %2791 = vadd.xlane.f32.xlu0 %v2790
  %v2792 = vpop.xlane.xlu0 %2791
  %v2793 = vsel %vm1359, %v2592, 0.0
  %2794 = vadd.xlane.f32.xlu0 %v2793
  %v2795 = vpop.xlane.xlu0 %2794
  %v2796 = vsel %vm1359, %v2593, 0.0
  %2797 = vadd.xlane.f32.xlu0 %v2796
  %v2798 = vpop.xlane.xlu0 %2797
  %v2799 = vsel %vm1359, %v2594, 0.0
  %2800 = vadd.xlane.f32.xlu0 %v2799
  %v2801 = vpop.xlane.xlu0 %2800
  %v2802 = vsel %vm1359, %v2595, 0.0
  %2803 = vadd.xlane.f32.xlu0 %v2802
  %v2804 = vpop.xlane.xlu0 %2803
  %v2805 = vsel %vm1359, %v2596, 0.0
  %2806 = vadd.xlane.f32.xlu0 %v2805
  %v2807 = vpop.xlane.xlu0 %2806
  %v2808 = vsel %vm1359, %v2597, 0.0
  %2809 = vadd.xlane.f32.xlu0 %v2808
  %v2810 = vpop.xlane.xlu0 %2809
  %v2811 = vsel %vm1359, %v2598, 0.0
  %2812 = vadd.xlane.f32.xlu0 %v2811
  %v2813 = vpop.xlane.xlu0 %2812
  %v2814 = vsel %vm1359, %v2599, 0.0
  %2815 = vadd.xlane.f32.xlu0 %v2814
  %v2816 = vpop.xlane.xlu0 %2815
  %v2817 = vsel %vm1359, %v2600, 0.0
  %2818 = vadd.xlane.f32.xlu0 %v2817
  %v2819 = vpop.xlane.xlu0 %2818
  %v2820 = vsel %vm1359, %v2601, 0.0
  %2821 = vadd.xlane.f32.xlu0 %v2820
  %v2822 = vpop.xlane.xlu0 %2821
  %v2823 = vsel %vm1359, %v2602, 0.0
  %2824 = vadd.xlane.f32.xlu0 %v2823
  %v2825 = vpop.xlane.xlu0 %2824
  %v2826 = vsel %vm1359, %v2603, 0.0
  %2827 = vadd.xlane.f32.xlu0 %v2826
  %v2828 = vpop.xlane.xlu0 %2827
  %v2829 = vsel %vm1359, %v2604, 0.0
  %2830 = vadd.xlane.f32.xlu0 %v2829
  %v2831 = vpop.xlane.xlu0 %2830
  %v2832 = vsel %vm1359, %v2605, 0.0
  %2833 = vadd.xlane.f32.xlu0 %v2832
  %v2834 = vpop.xlane.xlu0 %2833
  %v2835 = vsel %vm1359, %v2606, 0.0
  %2836 = vadd.xlane.f32.xlu0 %v2835
  %v2837 = vpop.xlane.xlu0 %2836
  %v2838 = vsel %vm1359, %v2607, 0.0
  %2839 = vadd.xlane.f32.xlu0 %v2838
  %v2840 = vpop.xlane.xlu0 %2839
  %v2841 = vsel %vm1359, %v2608, 0.0
  %2842 = vadd.xlane.f32.xlu0 %v2841
  %v2843 = vpop.xlane.xlu0 %2842
  %v2844 = vsel %vm1359, %v2609, 0.0
  %2845 = vadd.xlane.f32.xlu0 %v2844
  %v2846 = vpop.xlane.xlu0 %2845
  %v2847 = vsel %vm1359, %v2610, 0.0
  %2848 = vadd.xlane.f32.xlu0 %v2847
  %v2849 = vpop.xlane.xlu0 %2848
  %v2850 = vsel %vm1359, %v2611, 0.0
  %2851 = vadd.xlane.f32.xlu0 %v2850
  %v2852 = vpop.xlane.xlu0 %2851
  %v2853 = vsel %vm1359, %v2612, 0.0
  %2854 = vadd.xlane.f32.xlu0 %v2853
  %v2855 = vpop.xlane.xlu0 %2854
  %v2856 = vsel %vm1359, %v2613, 0.0
  %2857 = vadd.xlane.f32.xlu0 %v2856
  %v2858 = vpop.xlane.xlu0 %2857
  %v2859 = vsel %vm1359, %v2614, 0.0
  %2860 = vadd.xlane.f32.xlu0 %v2859
  %v2861 = vpop.xlane.xlu0 %2860
  %v2862 = vsel %vm1359, %v2615, 0.0
  %2863 = vadd.xlane.f32.xlu0 %v2862
  %v2864 = vpop.xlane.xlu0 %2863
  %v2865 = vsel %vm1359, %v2616, 0.0
  %2866 = vadd.xlane.f32.xlu0 %v2865
  %v2867 = vpop.xlane.xlu0 %2866
  %v2868 = vsel %vm1359, %v2617, 0.0
  %2869 = vadd.xlane.f32.xlu0 %v2868
  %v2870 = vpop.xlane.xlu0 %2869
  %v2871 = vsel %vm1359, %v2618, 0.0
  %2872 = vadd.xlane.f32.xlu0 %v2871
  %v2873 = vpop.xlane.xlu0 %2872
  %v2874 = vsel %vm1359, %v2619, 0.0
  %2875 = vadd.xlane.f32.xlu0 %v2874
  %v2876 = vpop.xlane.xlu0 %2875
  %v2877 = vsel %vm1359, %v2620, 0.0
  %2878 = vadd.xlane.f32.xlu0 %v2877
  %v2879 = vpop.xlane.xlu0 %2878
  %v2880 = vsel %vm1359, %v2621, 0.0
  %2881 = vadd.xlane.f32.xlu0 %v2880
  %v2882 = vpop.xlane.xlu0 %2881
  %v2883 = vsel %vm1359, %v2622, 0.0
  %2884 = vadd.xlane.f32.xlu0 %v2883
  %v2885 = vpop.xlane.xlu0 %2884
  %v2886 = vsel %vm1359, %v2623, 0.0
  %2887 = vadd.xlane.f32.xlu0 %v2886
  %v2888 = vpop.xlane.xlu0 %2887
  %v2889 = vsel %vm1359, %v2624, 0.0
  %2890 = vadd.xlane.f32.xlu0 %v2889
  %v2891 = vpop.xlane.xlu0 %2890
  %v2892 = vsel %vm1359, %v2625, 0.0
  %2893 = vadd.xlane.f32.xlu0 %v2892
  %v2894 = vpop.xlane.xlu0 %2893
  %v2895 = vsel %vm1359, %v2626, 0.0
  %2896 = vadd.xlane.f32.xlu0 %v2895
  %v2897 = vpop.xlane.xlu0 %2896
  %v2898 = vsel %vm1359, %v2627, 0.0
  %2899 = vadd.xlane.f32.xlu0 %v2898
  %v2900 = vpop.xlane.xlu0 %2899
  %v2901 = vsel %vm1359, %v2628, 0.0
  %2902 = vadd.xlane.f32.xlu0 %v2901
  %v2903 = vpop.xlane.xlu0 %2902
  %v2904 = vsel %vm1359, %v2629, 0.0
  %2905 = vadd.xlane.f32.xlu0 %v2904
  %v2906 = vpop.xlane.xlu0 %2905
  %v2907 = vsel %vm1359, %v2630, 0.0
  %2908 = vadd.xlane.f32.xlu0 %v2907
  %v2909 = vpop.xlane.xlu0 %2908
  %v2910 = vsel %vm1359, %v2631, 0.0
  %2911 = vadd.xlane.f32.xlu0 %v2910
  %v2912 = vpop.xlane.xlu0 %2911
  %v2913 = vsel %vm1359, %v2632, 0.0
  %2914 = vadd.xlane.f32.xlu0 %v2913
  %v2915 = vpop.xlane.xlu0 %2914
  %v2916 = vsel %vm1359, %v2633, 0.0
  %2917 = vadd.xlane.f32.xlu0 %v2916
  %v2918 = vpop.xlane.xlu0 %2917
  %v2919 = vsel %vm1359, %v2634, 0.0
  %2920 = vadd.xlane.f32.xlu0 %v2919
  %v2921 = vpop.xlane.xlu0 %2920
  %v2922 = vsel %vm1359, %v2635, 0.0
  %2923 = vadd.xlane.f32.xlu0 %v2922
  %v2924 = vpop.xlane.xlu0 %2923
  %v2925 = vsel %vm1359, %v2636, 0.0
  %2926 = vadd.xlane.f32.xlu0 %v2925
  %v2927 = vpop.xlane.xlu0 %2926
  %v2928 = vsel %vm1359, %v2637, 0.0
  %2929 = vadd.xlane.f32.xlu0 %v2928
  %v2930 = vpop.xlane.xlu0 %2929
  %v2931 = vsel %vm1359, %v2638, 0.0
  %2932 = vadd.xlane.f32.xlu0 %v2931
  %v2933 = vpop.xlane.xlu0 %2932
  %v2934 = vsel %vm1359, %v2639, 0.0
  %2935 = vadd.xlane.f32.xlu0 %v2934
  %v2936 = vpop.xlane.xlu0 %2935
  %v2937 = vsel %vm1359, %v2640, 0.0
  %2938 = vadd.xlane.f32.xlu0 %v2937
  %v2939 = vpop.xlane.xlu0 %2938
  %v2940 = vsel %vm1359, %v2641, 0.0
  %2941 = vadd.xlane.f32.xlu0 %v2940
  %v2942 = vpop.xlane.xlu0 %2941
  %v2943 = vsel %vm1359, %v2642, 0.0
  %2944 = vadd.xlane.f32.xlu0 %v2943
  %v2945 = vpop.xlane.xlu0 %2944
  %v2946 = vsel %vm1359, %v2643, 0.0
  %2947 = vadd.xlane.f32.xlu0 %v2946
  %v2948 = vpop.xlane.xlu0 %2947
  %v2949 = vsel %vm1359, %v2644, 0.0
  %2950 = vadd.xlane.f32.xlu0 %v2949
  %v2951 = vpop.xlane.xlu0 %2950
  %v2952 = vsel %vm1359, %v2645, 0.0
  %2953 = vadd.xlane.f32.xlu0 %v2952
  %v2954 = vpop.xlane.xlu0 %2953
  %v2955 = vsel %vm1359, %v2646, 0.0
  %2956 = vadd.xlane.f32.xlu0 %v2955
  %v2957 = vpop.xlane.xlu0 %2956
  %v2958 = vsel %vm1359, %v2647, 0.0
  %2959 = vadd.xlane.f32.xlu0 %v2958
  %v2960 = vpop.xlane.xlu0 %2959
  %v2961 = vsel %vm1359, %v2648, 0.0
  %2962 = vadd.xlane.f32.xlu0 %v2961
  %v2963 = vpop.xlane.xlu0 %2962
  %v2964 = vsel %vm1359, %v2649, 0.0
  %2965 = vadd.xlane.f32.xlu0 %v2964
  %v2966 = vpop.xlane.xlu0 %2965
  %v2967 = vsel %vm1359, %v2650, 0.0
  %2968 = vadd.xlane.f32.xlu0 %v2967
  %v2969 = vpop.xlane.xlu0 %2968
  %v2970 = vsel %vm1359, %v2651, 0.0
  %2971 = vadd.xlane.f32.xlu0 %v2970
  %v2972 = vpop.xlane.xlu0 %2971
  %v2973 = vsel %vm1359, %v2652, 0.0
  %2974 = vadd.xlane.f32.xlu0 %v2973
  %v2975 = vpop.xlane.xlu0 %2974
  %v2976 = vsel %vm1359, %v2653, 0.0
  %2977 = vadd.xlane.f32.xlu0 %v2976
  %v2978 = vpop.xlane.xlu0 %2977
  %v2979 = vsel %vm1359, %v2654, 0.0
  %2980 = vadd.xlane.f32.xlu0 %v2979
  %v2981 = vpop.xlane.xlu0 %2980
  %v2982 = vsel %vm1359, %v2655, 0.0
  %2983 = vadd.xlane.f32.xlu0 %v2982
  %v2984 = vpop.xlane.xlu0 %2983
  %v2985 = vsel %vm1359, %v2656, 0.0
  %2986 = vadd.xlane.f32.xlu0 %v2985
  %v2987 = vpop.xlane.xlu0 %2986
  %v2988 = vsel %vm1359, %v2657, 0.0
  %2989 = vadd.xlane.f32.xlu0 %v2988
  %v2990 = vpop.xlane.xlu0 %2989
  %v2991 = vsel %vm1359, %v2658, 0.0
  %2992 = vadd.xlane.f32.xlu0 %v2991
  %v2993 = vpop.xlane.xlu0 %2992
  %v2994 = vsel %vm1359, %v2659, 0.0
  %2995 = vadd.xlane.f32.xlu0 %v2994
  %v2996 = vpop.xlane.xlu0 %2995
  %v2997 = vsel %vm1359, %v2660, 0.0
  %2998 = vadd.xlane.f32.xlu0 %v2997
  %v2999 = vpop.xlane.xlu0 %2998
  %v3000 = vsel %vm1359, %v2661, 0.0
  %3001 = vadd.xlane.f32.xlu0 %v3000
  %v3002 = vpop.xlane.xlu0 %3001
  %v3003 = vsel %vm1359, %v2662, 0.0
  %3004 = vadd.xlane.f32.xlu0 %v3003
  %v3005 = vpop.xlane.xlu0 %3004
  %v3006 = vsel %vm1359, %v2663, 0.0
  %3007 = vadd.xlane.f32.xlu0 %v3006
  %v3008 = vpop.xlane.xlu0 %3007
  %v3009 = vsel %vm1359, %v2664, 0.0
  %3010 = vadd.xlane.f32.xlu0 %v3009
  %v3011 = vpop.xlane.xlu0 %3010
  %v3012 = vsel %vm1359, %v2665, 0.0
  %3013 = vadd.xlane.f32.xlu0 %v3012
  %v3014 = vpop.xlane.xlu0 %3013
  %v3015 = vsel %vm1359, %v2666, 0.0
  %3016 = vadd.xlane.f32.xlu0 %v3015
  %v3017 = vpop.xlane.xlu0 %3016
  %v3018 = vsel %vm1359, %v2667, 0.0
  %3019 = vadd.xlane.f32.xlu0 %v3018
  %v3020 = vpop.xlane.xlu0 %3019
  %v3021 = vsel %vm1359, %v2668, 0.0
  %3022 = vadd.xlane.f32.xlu0 %v3021
  %v3023 = vpop.xlane.xlu0 %3022
  %v3024 = vsel %vm1359, %v2669, 0.0
  %3025 = vadd.xlane.f32.xlu0 %v3024
  %v3026 = vpop.xlane.xlu0 %3025
  %v3027 = vsel %vm1359, %v2670, 0.0
  %3028 = vadd.xlane.f32.xlu0 %v3027
  %v3029 = vpop.xlane.xlu0 %3028
  %v3030 = vsel %vm1359, %v2671, 0.0
  %3031 = vadd.xlane.f32.xlu0 %v3030
  %v3032 = vpop.xlane.xlu0 %3031
  %v3033 = vsel %vm1359, %v2672, 0.0
  %3034 = vadd.xlane.f32.xlu0 %v3033
  %v3035 = vpop.xlane.xlu0 %3034
  %v3036 = vsel %vm1359, %v2673, 0.0
  %3037 = vadd.xlane.f32.xlu0 %v3036
  %v3038 = vpop.xlane.xlu0 %3037
  %v3039 = vsel %vm1359, %v2674, 0.0
  %3040 = vadd.xlane.f32.xlu0 %v3039
  %v3041 = vpop.xlane.xlu0 %3040
  %v3042 = vsel %vm1359, %v2675, 0.0
  %3043 = vadd.xlane.f32.xlu0 %v3042
  %v3044 = vpop.xlane.xlu0 %3043
  %v3045 = vsel %vm1359, %v2676, 0.0
  %3046 = vadd.xlane.f32.xlu0 %v3045
  %v3047 = vpop.xlane.xlu0 %3046
  %v3048 = vsel %vm1359, %v2677, 0.0
  %3049 = vadd.xlane.f32.xlu0 %v3048
  %v3050 = vpop.xlane.xlu0 %3049
  %v3051 = vsel %vm1359, %v2678, 0.0
  %3052 = vadd.xlane.f32.xlu0 %v3051
  %v3053 = vpop.xlane.xlu0 %3052
  %v3054 = vlaneseq
  %v3055 = vshrl.u32 %v3054, 7
  %v3056 = vsub.s32 0, %v3055
  %v3057 = vrot.slane %v145, %v3056
  %v3058 = vadd.f32 %v2681, %v3057
  %v3059 = vadd.f32 %v2684, %v3057
  %v3060 = vadd.f32 %v2687, %v3057
  %v3061 = vadd.f32 %v2690, %v3057
  %v3062 = vadd.f32 %v2693, %v3057
  %v3063 = vadd.f32 %v2696, %v3057
  %v3064 = vadd.f32 %v2699, %v3057
  %v3065 = vadd.f32 %v2702, %v3057
  %v3066 = vadd.f32 %v2705, %v3057
  %v3067 = vadd.f32 %v2708, %v3057
  %v3068 = vadd.f32 %v2711, %v3057
  %v3069 = vadd.f32 %v2714, %v3057
  %v3070 = vadd.f32 %v2717, %v3057
  %v3071 = vadd.f32 %v2720, %v3057
  %v3072 = vadd.f32 %v2723, %v3057
  %v3073 = vadd.f32 %v2726, %v3057
  %v3074 = vadd.f32 %v2729, %v3057
  %v3075 = vadd.f32 %v2732, %v3057
  %v3076 = vadd.f32 %v2735, %v3057
  %v3077 = vadd.f32 %v2738, %v3057
  %v3078 = vadd.f32 %v2741, %v3057
  %v3079 = vadd.f32 %v2744, %v3057
  %v3080 = vadd.f32 %v2747, %v3057
  %v3081 = vadd.f32 %v2750, %v3057
  %v3082 = vadd.f32 %v2753, %v3057
  %v3083 = vadd.f32 %v2756, %v3057
  %v3084 = vadd.f32 %v2759, %v3057
  %v3085 = vadd.f32 %v2762, %v3057
  %v3086 = vadd.f32 %v2765, %v3057
  %v3087 = vadd.f32 %v2768, %v3057
  %v3088 = vadd.f32 %v2771, %v3057
  %v3089 = vadd.f32 %v2774, %v3057
  %v3090 = vadd.f32 %v2777, %v3057
  %v3091 = vadd.f32 %v2780, %v3057
  %v3092 = vadd.f32 %v2783, %v3057
  %v3093 = vadd.f32 %v2786, %v3057
  %v3094 = vadd.f32 %v2789, %v3057
  %v3095 = vadd.f32 %v2792, %v3057
  %v3096 = vadd.f32 %v2795, %v3057
  %v3097 = vadd.f32 %v2798, %v3057
  %v3098 = vadd.f32 %v2801, %v3057
  %v3099 = vadd.f32 %v2804, %v3057
  %v3100 = vadd.f32 %v2807, %v3057
  %v3101 = vadd.f32 %v2810, %v3057
  %v3102 = vadd.f32 %v2813, %v3057
  %v3103 = vadd.f32 %v2816, %v3057
  %v3104 = vadd.f32 %v2819, %v3057
  %v3105 = vadd.f32 %v2822, %v3057
  %v3106 = vadd.f32 %v2825, %v3057
  %v3107 = vadd.f32 %v2828, %v3057
  %v3108 = vadd.f32 %v2831, %v3057
  %v3109 = vadd.f32 %v2834, %v3057
  %v3110 = vadd.f32 %v2837, %v3057
  %v3111 = vadd.f32 %v2840, %v3057
  %v3112 = vadd.f32 %v2843, %v3057
  %v3113 = vadd.f32 %v2846, %v3057
  %v3114 = vadd.f32 %v2849, %v3057
  %v3115 = vadd.f32 %v2852, %v3057
  %v3116 = vadd.f32 %v2855, %v3057
  %v3117 = vadd.f32 %v2858, %v3057
  %v3118 = vadd.f32 %v2861, %v3057
  %v3119 = vadd.f32 %v2864, %v3057
  %v3120 = vadd.f32 %v2867, %v3057
  %v3121 = vadd.f32 %v2870, %v3057
  %v3122 = vadd.f32 %v2873, %v3057
  %v3123 = vadd.f32 %v2876, %v3057
  %v3124 = vadd.f32 %v2879, %v3057
  %v3125 = vadd.f32 %v2882, %v3057
  %v3126 = vadd.f32 %v2885, %v3057
  %v3127 = vadd.f32 %v2888, %v3057
  %v3128 = vadd.f32 %v2891, %v3057
  %v3129 = vadd.f32 %v2894, %v3057
  %v3130 = vadd.f32 %v2897, %v3057
  %v3131 = vadd.f32 %v2900, %v3057
  %v3132 = vadd.f32 %v2903, %v3057
  %v3133 = vadd.f32 %v2906, %v3057
  %v3134 = vadd.f32 %v2909, %v3057
  %v3135 = vadd.f32 %v2912, %v3057
  %v3136 = vadd.f32 %v2915, %v3057
  %v3137 = vadd.f32 %v2918, %v3057
  %v3138 = vadd.f32 %v2921, %v3057
  %v3139 = vadd.f32 %v2924, %v3057
  %v3140 = vadd.f32 %v2927, %v3057
  %v3141 = vadd.f32 %v2930, %v3057
  %v3142 = vadd.f32 %v2933, %v3057
  %v3143 = vadd.f32 %v2936, %v3057
  %v3144 = vadd.f32 %v2939, %v3057
  %v3145 = vadd.f32 %v2942, %v3057
  %v3146 = vadd.f32 %v2945, %v3057
  %v3147 = vadd.f32 %v2948, %v3057
  %v3148 = vadd.f32 %v2951, %v3057
  %v3149 = vadd.f32 %v2954, %v3057
  %v3150 = vadd.f32 %v2957, %v3057
  %v3151 = vadd.f32 %v2960, %v3057
  %v3152 = vadd.f32 %v2963, %v3057
  %v3153 = vadd.f32 %v2966, %v3057
  %v3154 = vadd.f32 %v2969, %v3057
  %v3155 = vadd.f32 %v2972, %v3057
  %v3156 = vadd.f32 %v2975, %v3057
  %v3157 = vadd.f32 %v2978, %v3057
  %v3158 = vadd.f32 %v2981, %v3057
  %v3159 = vadd.f32 %v2984, %v3057
  %v3160 = vadd.f32 %v2987, %v3057
  %v3161 = vadd.f32 %v2990, %v3057
  %v3162 = vadd.f32 %v2993, %v3057
  %v3163 = vadd.f32 %v2996, %v3057
  %v3164 = vadd.f32 %v2999, %v3057
  %v3165 = vadd.f32 %v3002, %v3057
  %v3166 = vadd.f32 %v3005, %v3057
  %v3167 = vadd.f32 %v3008, %v3057
  %v3168 = vadd.f32 %v3011, %v3057
  %v3169 = vadd.f32 %v3014, %v3057
  %v3170 = vadd.f32 %v3017, %v3057
  %v3171 = vadd.f32 %v3020, %v3057
  %v3172 = vadd.f32 %v3023, %v3057
  %v3173 = vadd.f32 %v3026, %v3057
  %v3174 = vadd.f32 %v3029, %v3057
  %v3175 = vadd.f32 %v3032, %v3057
  %v3176 = vadd.f32 %v3035, %v3057
  %v3177 = vadd.f32 %v3038, %v3057
  %v3178 = vadd.f32 %v3041, %v3057
  %v3179 = vadd.f32 %v3044, %v3057
  %v3180 = vadd.f32 %v3047, %v3057
  %v3181 = vadd.f32 %v3050, %v3057
  %v3182 = vadd.f32 %v3053, %v3057
  %vm3183 = vcmask 7168
  %3184 = vst.msk [vmem:[%s4] sm:$0xff] %vm3183, %v3058
  %3185 = vst.msk [vmem:[%s4 + $0x8] sm:$0xff] %vm3183, %v3059
  %3186 = vst.msk [vmem:[%s4 + $0x10] sm:$0xff] %vm3183, %v3060
  %3187 = vst.msk [vmem:[%s4 + $0x18] sm:$0xff] %vm3183, %v3061
  %3188 = vst.msk [vmem:[%s4 + $0x20] sm:$0xff] %vm3183, %v3062
  %3189 = vst.msk [vmem:[%s4 + $0x28] sm:$0xff] %vm3183, %v3063
  %3190 = vst.msk [vmem:[%s4 + $0x30] sm:$0xff] %vm3183, %v3064
  %3191 = vst.msk [vmem:[%s4 + $0x38] sm:$0xff] %vm3183, %v3065
  %3192 = vst.msk [vmem:[%s4 + $0x40] sm:$0xff] %vm3183, %v3066
  %3193 = vst.msk [vmem:[%s4 + $0x48] sm:$0xff] %vm3183, %v3067
  %3194 = vst.msk [vmem:[%s4 + $0x50] sm:$0xff] %vm3183, %v3068
  %3195 = vst.msk [vmem:[%s4 + $0x58] sm:$0xff] %vm3183, %v3069
  %3196 = vst.msk [vmem:[%s4 + $0x60] sm:$0xff] %vm3183, %v3070
  %3197 = vst.msk [vmem:[%s4 + $0x68] sm:$0xff] %vm3183, %v3071
  %3198 = vst.msk [vmem:[%s4 + $0x70] sm:$0xff] %vm3183, %v3072
  %3199 = vst.msk [vmem:[%s4 + $0x78] sm:$0xff] %vm3183, %v3073
  %3200 = vst.msk [vmem:[%s4 + $0x80] sm:$0xff] %vm3183, %v3074
  %3201 = vst.msk [vmem:[%s4 + $0x88] sm:$0xff] %vm3183, %v3075
  %3202 = vst.msk [vmem:[%s4 + $0x90] sm:$0xff] %vm3183, %v3076
  %3203 = vst.msk [vmem:[%s4 + $0x98] sm:$0xff] %vm3183, %v3077
  %3204 = vst.msk [vmem:[%s4 + $0xa0] sm:$0xff] %vm3183, %v3078
  %3205 = vst.msk [vmem:[%s4 + $0xa8] sm:$0xff] %vm3183, %v3079
  %3206 = vst.msk [vmem:[%s4 + $0xb0] sm:$0xff] %vm3183, %v3080
  %3207 = vst.msk [vmem:[%s4 + $0xb8] sm:$0xff] %vm3183, %v3081
  %3208 = vst.msk [vmem:[%s4 + $0xc0] sm:$0xff] %vm3183, %v3082
  %3209 = vst.msk [vmem:[%s4 + $0xc8] sm:$0xff] %vm3183, %v3083
  %3210 = vst.msk [vmem:[%s4 + $0xd0] sm:$0xff] %vm3183, %v3084
  %3211 = vst.msk [vmem:[%s4 + $0xd8] sm:$0xff] %vm3183, %v3085
  %3212 = vst.msk [vmem:[%s4 + $0xe0] sm:$0xff] %vm3183, %v3086
  %3213 = vst.msk [vmem:[%s4 + $0xe8] sm:$0xff] %vm3183, %v3087
  %3214 = vst.msk [vmem:[%s4 + $0xf0] sm:$0xff] %vm3183, %v3088
  %3215 = vst.msk [vmem:[%s4 + $0xf8] sm:$0xff] %vm3183, %v3089
  %3216 = vst.msk [vmem:[%s4 + $0x100] sm:$0xff] %vm3183, %v3090
  %3217 = vst.msk [vmem:[%s4 + $0x108] sm:$0xff] %vm3183, %v3091
  %3218 = vst.msk [vmem:[%s4 + $0x110] sm:$0xff] %vm3183, %v3092
  %3219 = vst.msk [vmem:[%s4 + $0x118] sm:$0xff] %vm3183, %v3093
  %3220 = vst.msk [vmem:[%s4 + $0x120] sm:$0xff] %vm3183, %v3094
  %3221 = vst.msk [vmem:[%s4 + $0x128] sm:$0xff] %vm3183, %v3095
  %3222 = vst.msk [vmem:[%s4 + $0x130] sm:$0xff] %vm3183, %v3096
  %3223 = vst.msk [vmem:[%s4 + $0x138] sm:$0xff] %vm3183, %v3097
  %3224 = vst.msk [vmem:[%s4 + $0x140] sm:$0xff] %vm3183, %v3098
  %3225 = vst.msk [vmem:[%s4 + $0x148] sm:$0xff] %vm3183, %v3099
  %3226 = vst.msk [vmem:[%s4 + $0x150] sm:$0xff] %vm3183, %v3100
  %3227 = vst.msk [vmem:[%s4 + $0x158] sm:$0xff] %vm3183, %v3101
  %3228 = vst.msk [vmem:[%s4 + $0x160] sm:$0xff] %vm3183, %v3102
  %3229 = vst.msk [vmem:[%s4 + $0x168] sm:$0xff] %vm3183, %v3103
  %3230 = vst.msk [vmem:[%s4 + $0x170] sm:$0xff] %vm3183, %v3104
  %3231 = vst.msk [vmem:[%s4 + $0x178] sm:$0xff] %vm3183, %v3105
  %3232 = vst.msk [vmem:[%s4 + $0x180] sm:$0xff] %vm3183, %v3106
  %3233 = vst.msk [vmem:[%s4 + $0x188] sm:$0xff] %vm3183, %v3107
  %3234 = vst.msk [vmem:[%s4 + $0x190] sm:$0xff] %vm3183, %v3108
  %3235 = vst.msk [vmem:[%s4 + $0x198] sm:$0xff] %vm3183, %v3109
  %3236 = vst.msk [vmem:[%s4 + $0x1a0] sm:$0xff] %vm3183, %v3110
  %3237 = vst.msk [vmem:[%s4 + $0x1a8] sm:$0xff] %vm3183, %v3111
  %3238 = vst.msk [vmem:[%s4 + $0x1b0] sm:$0xff] %vm3183, %v3112
  %3239 = vst.msk [vmem:[%s4 + $0x1b8] sm:$0xff] %vm3183, %v3113
  %3240 = vst.msk [vmem:[%s4 + $0x1c0] sm:$0xff] %vm3183, %v3114
  %3241 = vst.msk [vmem:[%s4 + $0x1c8] sm:$0xff] %vm3183, %v3115
  %3242 = vst.msk [vmem:[%s4 + $0x1d0] sm:$0xff] %vm3183, %v3116
  %3243 = vst.msk [vmem:[%s4 + $0x1d8] sm:$0xff] %vm3183, %v3117
  %3244 = vst.msk [vmem:[%s4 + $0x1e0] sm:$0xff] %vm3183, %v3118
  %3245 = vst.msk [vmem:[%s4 + $0x1e8] sm:$0xff] %vm3183, %v3119
  %3246 = vst.msk [vmem:[%s4 + $0x1f0] sm:$0xff] %vm3183, %v3120
  %3247 = vst.msk [vmem:[%s4 + $0x1f8] sm:$0xff] %vm3183, %v3121
  %3248 = vst.msk [vmem:[%s4 + $0x200] sm:$0xff] %vm3183, %v3122
  %3249 = vst.msk [vmem:[%s4 + $0x208] sm:$0xff] %vm3183, %v3123
  %3250 = vst.msk [vmem:[%s4 + $0x210] sm:$0xff] %vm3183, %v3124
  %3251 = vst.msk [vmem:[%s4 + $0x218] sm:$0xff] %vm3183, %v3125
  %3252 = vst.msk [vmem:[%s4 + $0x220] sm:$0xff] %vm3183, %v3126
  %3253 = vst.msk [vmem:[%s4 + $0x228] sm:$0xff] %vm3183, %v3127
  %3254 = vst.msk [vmem:[%s4 + $0x230] sm:$0xff] %vm3183, %v3128
  %3255 = vst.msk [vmem:[%s4 + $0x238] sm:$0xff] %vm3183, %v3129
  %3256 = vst.msk [vmem:[%s4 + $0x240] sm:$0xff] %vm3183, %v3130
  %3257 = vst.msk [vmem:[%s4 + $0x248] sm:$0xff] %vm3183, %v3131
  %3258 = vst.msk [vmem:[%s4 + $0x250] sm:$0xff] %vm3183, %v3132
  %3259 = vst.msk [vmem:[%s4 + $0x258] sm:$0xff] %vm3183, %v3133
  %3260 = vst.msk [vmem:[%s4 + $0x260] sm:$0xff] %vm3183, %v3134
  %3261 = vst.msk [vmem:[%s4 + $0x268] sm:$0xff] %vm3183, %v3135
  %3262 = vst.msk [vmem:[%s4 + $0x270] sm:$0xff] %vm3183, %v3136
  %3263 = vst.msk [vmem:[%s4 + $0x278] sm:$0xff] %vm3183, %v3137
  %3264 = vst.msk [vmem:[%s4 + $0x280] sm:$0xff] %vm3183, %v3138
  %3265 = vst.msk [vmem:[%s4 + $0x288] sm:$0xff] %vm3183, %v3139
  %3266 = vst.msk [vmem:[%s4 + $0x290] sm:$0xff] %vm3183, %v3140
  %3267 = vst.msk [vmem:[%s4 + $0x298] sm:$0xff] %vm3183, %v3141
  %3268 = vst.msk [vmem:[%s4 + $0x2a0] sm:$0xff] %vm3183, %v3142
  %3269 = vst.msk [vmem:[%s4 + $0x2a8] sm:$0xff] %vm3183, %v3143
  %3270 = vst.msk [vmem:[%s4 + $0x2b0] sm:$0xff] %vm3183, %v3144
  %3271 = vst.msk [vmem:[%s4 + $0x2b8] sm:$0xff] %vm3183, %v3145
  %3272 = vst.msk [vmem:[%s4 + $0x2c0] sm:$0xff] %vm3183, %v3146
  %3273 = vst.msk [vmem:[%s4 + $0x2c8] sm:$0xff] %vm3183, %v3147
  %3274 = vst.msk [vmem:[%s4 + $0x2d0] sm:$0xff] %vm3183, %v3148
  %3275 = vst.msk [vmem:[%s4 + $0x2d8] sm:$0xff] %vm3183, %v3149
  %3276 = vst.msk [vmem:[%s4 + $0x2e0] sm:$0xff] %vm3183, %v3150
  %3277 = vst.msk [vmem:[%s4 + $0x2e8] sm:$0xff] %vm3183, %v3151
  %3278 = vst.msk [vmem:[%s4 + $0x2f0] sm:$0xff] %vm3183, %v3152
  %3279 = vst.msk [vmem:[%s4 + $0x2f8] sm:$0xff] %vm3183, %v3153
  %3280 = vst.msk [vmem:[%s4 + $0x300] sm:$0xff] %vm3183, %v3154
  %3281 = vst.msk [vmem:[%s4 + $0x308] sm:$0xff] %vm3183, %v3155
  %3282 = vst.msk [vmem:[%s4 + $0x310] sm:$0xff] %vm3183, %v3156
  %3283 = vst.msk [vmem:[%s4 + $0x318] sm:$0xff] %vm3183, %v3157
  %3284 = vst.msk [vmem:[%s4 + $0x320] sm:$0xff] %vm3183, %v3158
  %3285 = vst.msk [vmem:[%s4 + $0x328] sm:$0xff] %vm3183, %v3159
  %3286 = vst.msk [vmem:[%s4 + $0x330] sm:$0xff] %vm3183, %v3160
  %3287 = vst.msk [vmem:[%s4 + $0x338] sm:$0xff] %vm3183, %v3161
  %3288 = vst.msk [vmem:[%s4 + $0x340] sm:$0xff] %vm3183, %v3162
  %3289 = vst.msk [vmem:[%s4 + $0x348] sm:$0xff] %vm3183, %v3163
  %3290 = vst.msk [vmem:[%s4 + $0x350] sm:$0xff] %vm3183, %v3164
  %3291 = vst.msk [vmem:[%s4 + $0x358] sm:$0xff] %vm3183, %v3165
  %3292 = vst.msk [vmem:[%s4 + $0x360] sm:$0xff] %vm3183, %v3166
  %3293 = vst.msk [vmem:[%s4 + $0x368] sm:$0xff] %vm3183, %v3167
  %3294 = vst.msk [vmem:[%s4 + $0x370] sm:$0xff] %vm3183, %v3168
  %3295 = vst.msk [vmem:[%s4 + $0x378] sm:$0xff] %vm3183, %v3169
  %3296 = vst.msk [vmem:[%s4 + $0x380] sm:$0xff] %vm3183, %v3170
  %3297 = vst.msk [vmem:[%s4 + $0x388] sm:$0xff] %vm3183, %v3171
  %3298 = vst.msk [vmem:[%s4 + $0x390] sm:$0xff] %vm3183, %v3172
  %3299 = vst.msk [vmem:[%s4 + $0x398] sm:$0xff] %vm3183, %v3173
  %3300 = vst.msk [vmem:[%s4 + $0x3a0] sm:$0xff] %vm3183, %v3174
  %3301 = vst.msk [vmem:[%s4 + $0x3a8] sm:$0xff] %vm3183, %v3175
  %3302 = vst.msk [vmem:[%s4 + $0x3b0] sm:$0xff] %vm3183, %v3176
  %3303 = vst.msk [vmem:[%s4 + $0x3b8] sm:$0xff] %vm3183, %v3177
  %3304 = vst.msk [vmem:[%s4 + $0x3c0] sm:$0xff] %vm3183, %v3178
  %3305 = vst.msk [vmem:[%s4 + $0x3c8] sm:$0xff] %vm3183, %v3179
  %3306 = vst.msk [vmem:[%s4 + $0x3d0] sm:$0xff] %vm3183, %v3180
  %3307 = vst.msk [vmem:[%s4 + $0x3d8] sm:$0xff] %vm3183, %v3181
  %3308 = vst.msk [vmem:[%s4 + $0x3e0] sm:$0xff] %vm3183, %v3182
  // Predicated region
  $region18: #{value_network_forward.1} parent=0 // pred_check
    _
  $region19: #{value_network_forward.1} parent=0 // pred_check_branch
    %3310 = sbr.rel (0) target = $region21
  $region20: #{value_network_forward.1} parent=0 // pred_region
    _
  $region21: #{value_network_forward.1} parent=0 // pred_fallthru
    _
  // Predicated region
  $region22: #{value_network_forward.1} parent=0 // pred_check
    _
  $region23: #{value_network_forward.1} parent=0 // pred_check_branch
    %3312 = sbr.rel (0) target = $region25
  $region24: #{value_network_forward.1} parent=0 // pred_region
    _
  $region25: #{value_network_forward.1} parent=0 // pred_fallthru
    _

</llo_original>
